<compile_context>
chip_gen: v5e
topology: v5e:2x2
jax: 0.10.0
libtpu: 0.0.40
codegen_flags: <defaults>
</compile_context>

<pallas_src>
import functools

import jax
import jax.numpy as jnp
from jax.experimental import pallas as pl
from jax.experimental.pallas import tpu as pltpu

GN_EPS = 1e-5


# --------------------------- kernel 1: conv + GN + ReLU ----------------------
def _conv_gn_relu_kernel(x_ref, wk_ref, gamma_ref, beta_ref, mask_ref,
                         sameg_ref, o_ref, slab_ref, *,
                         Wp, eps, fuse_k, build_once):
    """One (image, channel-block) grid step.

    x_ref:      (Cin, P)  bf16, zero-padded image, row stride Wp = W + 2.
    wk_ref:     (CB, 9*Cin) bf16, taps folded into K (K = (dy*3+dx)*Cin + ci).
    gamma/beta: (CB, 1) f32.
    mask_ref:   (1, Q) f32, 1.0 on valid lanes (GroupNorm statistics only).
    sameg_ref:  (CB, CB) f32, same-group indicator pre-scaled by 1/(cpg*H*W).
    o_ref:      (CB, Q) f32 (final) or bf16 (upsample intermediate).
    slab_ref:   (9*Cin, Q) bf16 VMEM scratch (fused-K path only).
    """
    Cin = x_ref.shape[0]
    CB, Q = o_ref.shape

    if fuse_k:
        def build_slab():
            for tap in range(9):
                dy, dx = tap // 3, tap % 3
                off = dy * Wp + dx
                slab_ref[tap * Cin:(tap + 1) * Cin, :] = x_ref[:, off:off + Q]

        if build_once:
            # channel-block axis is "arbitrary": slab persists across the
            # channel blocks of one image -> 9 shifted copies paid once.
            pl.when(pl.program_id(1) == 0)(build_slab)
        else:
            build_slab()
        acc = jnp.dot(wk_ref[...], slab_ref[...],
                      preferred_element_type=jnp.float32)             # (CB, Q)
    else:
        # large-Cin fallback: per-tap matmuls straight from the padded image.
        acc = jnp.zeros((CB, Q), jnp.float32)
        for tap in range(9):
            dy, dx = tap // 3, tap % 3
            off = dy * Wp + dx
            acc = acc + jnp.dot(wk_ref[:, tap * Cin:(tap + 1) * Cin],
                                x_ref[:, off:off + Q],
                                preferred_element_type=jnp.float32)

    # ---- GroupNorm: masked lane reductions + one tiny group-reduce matmul --
    m = mask_ref[...]                                                  # (1, Q)
    am = acc * m
    s = jnp.sum(am, axis=-1, keepdims=True)                            # sum y
    s2 = jnp.sum(am * acc, axis=-1, keepdims=True)                     # sum y^2
    stats = jnp.concatenate([s, s2], axis=-1)                          # (CB, 2)
    g = jnp.dot(sameg_ref[...], stats,
                preferred_element_type=jnp.float32)                    # (CB, 2)
    mean = g[:, 0:1]
    var = jnp.maximum(g[:, 1:2] - mean * mean, 0.0)                    # clamp
    yn = (acc - mean) * jax.lax.rsqrt(var + eps)
    yn = yn * gamma_ref[...] + beta_ref[...]
    o_ref[...] = jnp.maximum(yn, 0.0).astype(o_ref.dtype)              # ReLU


# ------------------- kernel 2: separable bilinear x2 upsample ----------------
def _upsample_kernel(y_ref, awt_ref, ah_ref, o_ref, *, H):
    """Bilinear x2 (align_corners=True) for a CT-channel tile of one image.

    y_ref:   (CT*H, Wp) bf16 — conv/GN/ReLU output with the channel tile
             folded into M (the 2 pad columns hit zero rows of awt).
    awt_ref: (Wp, 2W) f32 — W-direction interpolation (pad rows are zero).
    ah_ref:  (2H, H) f32 — H-direction interpolation.
    o_ref:   (CT, 2H, 2W) f32.
    """
    CT, H2, W2 = o_ref.shape
    y = y_ref[...].astype(jnp.float32)                                 # (CT*H, Wp)
    t = jnp.dot(y, awt_ref[...], preferred_element_type=jnp.float32)   # (CT*H, 2W)
    t = t.reshape(CT, H, W2)
    ah_b = jnp.broadcast_to(ah_ref[...], (CT, H2, H))
    out = jax.lax.dot_general(ah_b, t, (((2,), (1,)), ((0,), (0,))),
                              preferred_element_type=jnp.float32)      # (CT, 2H, 2W)
    # TODO(synk): lane-dense (CT, 4*H*W) store once the trailing-dim merge
    # reshape is verified on Mosaic; 2W < 128 currently means masked stores.
    o_ref[...] = out.astype(o_ref.dtype)


# ----------------------------------- helpers ---------------------------------
def _interp_matrix(n):
    """(2n, n) bilinear interpolation matrix, scale 2, align_corners=True."""
    m = 2 * n
    if n == 1:
        return jnp.ones((m, 1), jnp.float32)
    src = jnp.arange(m, dtype=jnp.float32) * (n - 1) / (m - 1)
    lo = jnp.floor(src).astype(jnp.int32)
    hi = jnp.minimum(lo + 1, n - 1)
    frac = src - lo.astype(jnp.float32)
    A = jnp.zeros((m, n), jnp.float32)
    idx = jnp.arange(m)
    A = A.at[idx, lo].add(1.0 - frac)
    A = A.at[idx, hi].add(frac)
    return A


def _pick_channel_block(Cout, cpg, cap=128):
    """Largest divisor of Cout that is a whole number of groups and <= cap."""
    cap = max(cap, cpg)
    best = cpg
    for cb in range(cpg, Cout + 1, cpg):
        if Cout % cb == 0 and cb <= cap:
            best = cb
    if best % 8 != 0:           # keep the sublane dim of the blocks aligned
        best = Cout
    return best


def _pick_channel_tile(Cout, H, cap=64):
    """Channel tile for the upsample kernel (CT | Cout, CT*H sublane aligned)."""
    best = Cout
    for ct in range(1, min(Cout, cap) + 1):
        if Cout % ct == 0 and (ct * H) % 8 == 0:
            best = ct
    return best


def _vmem_limit(block_bytes):
    # double-buffered blocks + temporaries, capped v7x-safe (64 MiB physical).
    need = 3 * block_bytes
    return int(min(48 * 2 ** 20, max(32 * 2 ** 20, need)))


# ----------------------------------- wrapper ---------------------------------
def conv3x3_gn_relu(x, weight, gamma, beta, *, groups=32, upsample=False):
    """x: (N, Cin, H, W); weight: (Cout, Cin, 3, 3); gamma/beta: (Cout,)."""
    N, Cin, H, W = x.shape
    Cout = weight.shape[0]
    assert Cout % groups == 0
    cpg = Cout // groups
    Wp = W + 2
    Q = H * Wp
    P = (H + 3) * Wp   # extra zero row absorbs the (dy=2, dx=2) over-read

    # pad in bf16 (1 top / 2 bottom rows, 1 left / 1 right col), flatten.
    xpad = jnp.pad(x.astype(jnp.bfloat16), ((0, 0), (0, 0), (1, 2), (1, 1)))
    xflat = xpad.reshape(N, Cin, P)

    # weights with the 9 taps folded into K: wk[co, (dy*3+dx)*Cin + ci]
    wk = jnp.transpose(weight.astype(jnp.float32), (0, 2, 3, 1))
    wk = wk.reshape(Cout, 9 * Cin).astype(jnp.bfloat16)

    g2 = gamma.reshape(Cout, 1).astype(jnp.float32)
    b2 = beta.reshape(Cout, 1).astype(jnp.float32)

    col = jnp.arange(Q, dtype=jnp.int32) % Wp
    mask = (col < W).astype(jnp.float32).reshape(1, Q)

    # channel blocks = whole GroupNorm groups -> statistics stay block-local
    CB = _pick_channel_block(Cout, cpg)
    nCB = Cout // CB
    gidx = jnp.arange(CB, dtype=jnp.int32) // cpg
    sameg = (gidx[:, None] == gidx[None, :]).astype(jnp.float32)
    sameg = sameg / float(cpg * H * W)              # pre-scaled group reduce

    fuse_k = Cin <= 128                             # slab fits VMEM comfortably
    build_once = fuse_k and nCB > 1 and N > 1
    slab_shape = (9 * Cin, Q) if fuse_k else (8, 128)

    inter_dtype = jnp.bfloat16 if upsample else jnp.float32
    out_bytes = CB * Q * (2 if upsample else 4)
    blk1 = (Cin * P * 2 + CB * 9 * Cin * 2 + 2 * CB * 4 + Q * 4
            + CB * CB * 4 + out_bytes + CB * Q * 4
            + slab_shape[0] * slab_shape[1] * 2)

    kernel = functools.partial(_conv_gn_relu_kernel, Wp=Wp, eps=GN_EPS,
                               fuse_k=fuse_k, build_once=build_once)
    y_flat = pl.pallas_call(
        kernel,
        out_shape=jax.ShapeDtypeStruct((N, Cout, Q), inter_dtype),
        grid=(N, nCB),
        in_specs=[
            pl.BlockSpec((None, Cin, P), lambda n, c: (n, 0, 0)),
            pl.BlockSpec((CB, 9 * Cin), lambda n, c: (c, 0)),
            pl.BlockSpec((CB, 1), lambda n, c: (c, 0)),
            pl.BlockSpec((CB, 1), lambda n, c: (c, 0)),
            pl.BlockSpec((1, Q), lambda n, c: (0, 0)),
            pl.BlockSpec((CB, CB), lambda n, c: (0, 0)),
        ],
        out_specs=pl.BlockSpec((None, CB, Q), lambda n, c: (n, c, 0)),
        scratch_shapes=[pltpu.VMEM(slab_shape, jnp.bfloat16)],
        compiler_params=pltpu.CompilerParams(
            dimension_semantics=("parallel",
                                 "arbitrary" if build_once else "parallel"),
            vmem_limit_bytes=_vmem_limit(blk1)),
    )(xflat, wk, g2, b2, mask, sameg)

    if not upsample:
        y4 = y_flat.reshape(N, Cout, H, Wp)        # free metadata reshape
        return y4[:, :, :, :W]                     # drop the 2 pad columns

    # ---- bilinear x2 (align_corners=True): separable matmuls (kernel 2) ----
    H2, W2 = 2 * H, 2 * W
    ah = _interp_matrix(H)                                   # (2H, H)
    awt = _interp_matrix(W).T                                # (W, 2W)
    awt_p = jnp.pad(awt, ((0, 2), (0, 0)))                   # (Wp, 2W), zero pad rows

    CT = _pick_channel_tile(Cout, H)
    y3 = y_flat.reshape(N, Cout * H, Wp)           # free metadata reshape
    blk2 = (CT * H * Wp * 2 + Wp * W2 * 4 + H2 * H * 4
            + CT * H2 * W2 * 4 + CT * H * W2 * 4 + CT * H2 * H * 4)

    up_kernel = functools.partial(_upsample_kernel, H=H)
    out = pl.pallas_call(
        up_kernel,
        out_shape=jax.ShapeDtypeStruct((N, Cout, H2, W2), jnp.float32),
        grid=(N, Cout // CT),
        in_specs=[
            pl.BlockSpec((None, CT * H, Wp), lambda n, c: (n, c, 0)),
            pl.BlockSpec((Wp, W2), lambda n, c: (0, 0)),
            pl.BlockSpec((H2, H), lambda n, c: (0, 0)),
        ],
        out_specs=pl.BlockSpec((None, CT, H2, W2), lambda n, c: (n, c, 0, 0)),
        compiler_params=pltpu.CompilerParams(
            dimension_semantics=("parallel", "parallel"),
            vmem_limit_bytes=_vmem_limit(blk2)),
    )(y3, awt_p, ah)
    return out


# ------------------------- pure-JAX reference -------------------------------
def _bilinear_up2_align_corners(y):
    N, C, H, W = y.shape

    def coords(n):
        m = 2 * n
        src = jnp.arange(m, dtype=jnp.float32) * (n - 1) / (m - 1)
        lo = jnp.floor(src).astype(jnp.int32)
        hi = jnp.minimum(lo + 1, n - 1)
        return lo, hi, src - lo.astype(jnp.float32)

    h0, h1, fh = coords(H)
    w0, w1, fw = coords(W)
    yh = (y[:, :, h0, :] * (1 - fh)[None, None, :, None]
          + y[:, :, h1, :] * fh[None, None, :, None])
    return (yh[:, :, :, w0] * (1 - fw)[None, None, None, :]
            + yh[:, :, :, w1] * fw[None, None, None, :])


def _reference(x, weight, gamma, beta, groups, upsample):
    y = jax.lax.conv_general_dilated(
        x.astype(jnp.float32), weight.astype(jnp.float32), (1, 1), "SAME",
        dimension_numbers=("NCHW", "OIHW", "NCHW"),
        precision=jax.lax.Precision.HIGHEST)
    N, C, H, W = y.shape
    cpg = C // groups
    yg = y.reshape(N, groups, cpg, H, W)
    mean = yg.mean(axis=(2, 3, 4), keepdims=True)
    var = yg.var(axis=(2, 3, 4), keepdims=True)
    yn = (yg - mean) / jnp.sqrt(var + GN_EPS)
    yn = yn.reshape(N, C, H, W) * gamma.reshape(1, C, 1, 1) + beta.reshape(1, C, 1, 1)
    yr = jnp.maximum(yn, 0.0)
    if upsample:
        yr = _bilinear_up2_align_corners(yr)
    return yr


if __name__ == "__main__":
    # GroupNorm(32, Cout) requires Cout % 32 == 0
    N, Cin, Cout, H, W = 2, 16, 32, 16, 16
    groups = 32

    key = jax.random.PRNGKey(0)
    kx, kw, kg, kb = jax.random.split(key, 4)
    x = jax.random.normal(kx, (N, Cin, H, W), dtype=jnp.float32)
    weight = jax.random.normal(kw, (Cout, Cin, 3, 3), dtype=jnp.float32) * (2.0 / (Cin * 9)) ** 0.5
    gamma = 1.0 + 0.1 * jax.random.normal(kg, (Cout,), dtype=jnp.float32)
    beta = 0.1 * jax.random.normal(kb, (Cout,), dtype=jnp.float32)

    ok = True
    for upsample in (False, True):
        out = conv3x3_gn_relu(x, weight, gamma, beta, groups=groups, upsample=upsample)
        out = jax.block_until_ready(out)
        ref = _reference(x, weight, gamma, beta, groups, upsample)
        if out.shape != ref.shape or not bool(jnp.allclose(out, ref, atol=2e-2, rtol=2e-2)):
            ok = False
            err = (float(jnp.max(jnp.abs(out - ref)))
                   if out.shape == ref.shape else float("inf"))
            print(f"mismatch (upsample={upsample}): max abs err = {err:.3e}")

    if ok:
        print("KERNEL_OK")
</pallas_src>

<mosaic_0001>
module attributes {stable_mosaic.version = 11 : i64} {
  func.func @_conv_gn_relu_kernel(%arg0: i32, %arg1: i32, %arg2: memref<1x16x342xbf16, #tpu.memory_space<vmem>>, %arg3: memref<32x144xbf16, #tpu.memory_space<vmem>>, %arg4: memref<32x1xf32, #tpu.memory_space<vmem>>, %arg5: memref<32x1xf32, #tpu.memory_space<vmem>>, %arg6: memref<1x288xf32, #tpu.memory_space<vmem>>, %arg7: memref<32x32xf32, #tpu.memory_space<vmem>>, %arg8: memref<1x32x288xf32, #tpu.memory_space<vmem>>, %arg9: memref<144x288xbf16, #tpu.memory_space<vmem>>) attributes {dimension_semantics = [#tpu.dimension_semantics<parallel>, #tpu.dimension_semantics<parallel>], iteration_bounds = array<i64: 2, 1>, scalar_prefetch = 0 : i64, scratch_operands = 1 : i64, tpu.core_type = #tpu.core_type<tc>, window_params = [{transform_indices = @transform_0, window_bounds = array<i64: 1, 16, 342>}, {transform_indices = @transform_1, window_bounds = array<i64: 32, 144>}, {transform_indices = @transform_2, window_bounds = array<i64: 32, 1>}, {transform_indices = @transform_3, window_bounds = array<i64: 32, 1>}, {pipeline_mode = #tpu.pipeline_mode<synchronous>, transform_indices = @transform_4, window_bounds = array<i64: 1, 288>}, {pipeline_mode = #tpu.pipeline_mode<synchronous>, transform_indices = @transform_5, window_bounds = array<i64: 32, 32>}, {transform_indices = @transform_6, window_bounds = array<i64: 1, 32, 288>}]} {
    %c0 = arith.constant 0 : index
    %c0_0 = arith.constant 0 : index
    %c0_1 = arith.constant 0 : index
    %0 = vector.load %arg2[%c0, %c0_0, %c0_1] : memref<1x16x342xbf16, #tpu.memory_space<vmem>>, vector<1x16x288xbf16>
    %1 = vector.shape_cast %0 : vector<1x16x288xbf16> to vector<16x288xbf16>
    %c0_2 = arith.constant 0 : index
    %c0_3 = arith.constant 0 : index
    %2 = vector.load %arg9[%c0_2, %c0_3] : memref<144x288xbf16, #tpu.memory_space<vmem>>, vector<16x288xbf16>
    tpu.vector_store %arg9[%c0_2, %c0_3], %1 {strides = array<i32>} : memref<144x288xbf16, #tpu.memory_space<vmem>>, vector<16x288xbf16>,
    %c0_4 = arith.constant 0 : index
    %c0_5 = arith.constant 0 : index
    %c1 = arith.constant 1 : index
    %3 = vector.load %arg2[%c0_4, %c0_5, %c1] : memref<1x16x342xbf16, #tpu.memory_space<vmem>>, vector<1x16x288xbf16>
    %4 = vector.shape_cast %3 : vector<1x16x288xbf16> to vector<16x288xbf16>
    %c16 = arith.constant 16 : index
    %c0_6 = arith.constant 0 : index
    %5 = vector.load %arg9[%c16, %c0_6] : memref<144x288xbf16, #tpu.memory_space<vmem>>, vector<16x288xbf16>
    tpu.vector_store %arg9[%c16, %c0_6], %4 {strides = array<i32>} : memref<144x288xbf16, #tpu.memory_space<vmem>>, vector<16x288xbf16>,
    %c0_7 = arith.constant 0 : index
    %c0_8 = arith.constant 0 : index
    %c2 = arith.constant 2 : index
    %6 = vector.load %arg2[%c0_7, %c0_8, %c2] : memref<1x16x342xbf16, #tpu.memory_space<vmem>>, vector<1x16x288xbf16>
    %7 = vector.shape_cast %6 : vector<1x16x288xbf16> to vector<16x288xbf16>
    %c32 = arith.constant 32 : index
    %c0_9 = arith.constant 0 : index
    %8 = vector.load %arg9[%c32, %c0_9] : memref<144x288xbf16, #tpu.memory_space<vmem>>, vector<16x288xbf16>
    tpu.vector_store %arg9[%c32, %c0_9], %7 {strides = array<i32>} : memref<144x288xbf16, #tpu.memory_space<vmem>>, vector<16x288xbf16>,
    %c0_10 = arith.constant 0 : index
    %c0_11 = arith.constant 0 : index
    %c18 = arith.constant 18 : index
    %9 = vector.load %arg2[%c0_10, %c0_11, %c18] : memref<1x16x342xbf16, #tpu.memory_space<vmem>>, vector<1x16x288xbf16>
    %10 = vector.shape_cast %9 : vector<1x16x288xbf16> to vector<16x288xbf16>
    %c48 = arith.constant 48 : index
    %c0_12 = arith.constant 0 : index
    %11 = vector.load %arg9[%c48, %c0_12] : memref<144x288xbf16, #tpu.memory_space<vmem>>, vector<16x288xbf16>
    tpu.vector_store %arg9[%c48, %c0_12], %10 {strides = array<i32>} : memref<144x288xbf16, #tpu.memory_space<vmem>>, vector<16x288xbf16>,
    %c0_13 = arith.constant 0 : index
    %c0_14 = arith.constant 0 : index
    %c19 = arith.constant 19 : index
    %12 = vector.load %arg2[%c0_13, %c0_14, %c19] : memref<1x16x342xbf16, #tpu.memory_space<vmem>>, vector<1x16x288xbf16>
    %13 = vector.shape_cast %12 : vector<1x16x288xbf16> to vector<16x288xbf16>
    %c64 = arith.constant 64 : index
    %c0_15 = arith.constant 0 : index
    %14 = vector.load %arg9[%c64, %c0_15] : memref<144x288xbf16, #tpu.memory_space<vmem>>, vector<16x288xbf16>
    tpu.vector_store %arg9[%c64, %c0_15], %13 {strides = array<i32>} : memref<144x288xbf16, #tpu.memory_space<vmem>>, vector<16x288xbf16>,
    %c0_16 = arith.constant 0 : index
    %c0_17 = arith.constant 0 : index
    %c20 = arith.constant 20 : index
    %15 = vector.load %arg2[%c0_16, %c0_17, %c20] : memref<1x16x342xbf16, #tpu.memory_space<vmem>>, vector<1x16x288xbf16>
    %16 = vector.shape_cast %15 : vector<1x16x288xbf16> to vector<16x288xbf16>
    %c80 = arith.constant 80 : index
    %c0_18 = arith.constant 0 : index
    %17 = vector.load %arg9[%c80, %c0_18] : memref<144x288xbf16, #tpu.memory_space<vmem>>, vector<16x288xbf16>
    tpu.vector_store %arg9[%c80, %c0_18], %16 {strides = array<i32>} : memref<144x288xbf16, #tpu.memory_space<vmem>>, vector<16x288xbf16>,
    %c0_19 = arith.constant 0 : index
    %c0_20 = arith.constant 0 : index
    %c36 = arith.constant 36 : index
    %18 = vector.load %arg2[%c0_19, %c0_20, %c36] : memref<1x16x342xbf16, #tpu.memory_space<vmem>>, vector<1x16x288xbf16>
    %19 = vector.shape_cast %18 : vector<1x16x288xbf16> to vector<16x288xbf16>
    %c96 = arith.constant 96 : index
    %c0_21 = arith.constant 0 : index
    %20 = vector.load %arg9[%c96, %c0_21] : memref<144x288xbf16, #tpu.memory_space<vmem>>, vector<16x288xbf16>
    tpu.vector_store %arg9[%c96, %c0_21], %19 {strides = array<i32>} : memref<144x288xbf16, #tpu.memory_space<vmem>>, vector<16x288xbf16>,
    %c0_22 = arith.constant 0 : index
    %c0_23 = arith.constant 0 : index
    %c37 = arith.constant 37 : index
    %21 = vector.load %arg2[%c0_22, %c0_23, %c37] : memref<1x16x342xbf16, #tpu.memory_space<vmem>>, vector<1x16x288xbf16>
    %22 = vector.shape_cast %21 : vector<1x16x288xbf16> to vector<16x288xbf16>
    %c112 = arith.constant 112 : index
    %c0_24 = arith.constant 0 : index
    %23 = vector.load %arg9[%c112, %c0_24] : memref<144x288xbf16, #tpu.memory_space<vmem>>, vector<16x288xbf16>
    tpu.vector_store %arg9[%c112, %c0_24], %22 {strides = array<i32>} : memref<144x288xbf16, #tpu.memory_space<vmem>>, vector<16x288xbf16>,
    %c0_25 = arith.constant 0 : index
    %c0_26 = arith.constant 0 : index
    %c38 = arith.constant 38 : index
    %24 = vector.load %arg2[%c0_25, %c0_26, %c38] : memref<1x16x342xbf16, #tpu.memory_space<vmem>>, vector<1x16x288xbf16>
    %25 = vector.shape_cast %24 : vector<1x16x288xbf16> to vector<16x288xbf16>
    %c128 = arith.constant 128 : index
    %c0_27 = arith.constant 0 : index
    %26 = vector.load %arg9[%c128, %c0_27] : memref<144x288xbf16, #tpu.memory_space<vmem>>, vector<16x288xbf16>
    tpu.vector_store %arg9[%c128, %c0_27], %25 {strides = array<i32>} : memref<144x288xbf16, #tpu.memory_space<vmem>>, vector<16x288xbf16>,
    %c0_28 = arith.constant 0 : index
    %c0_29 = arith.constant 0 : index
    %27 = vector.load %arg3[%c0_28, %c0_29] : memref<32x144xbf16, #tpu.memory_space<vmem>>, vector<32x144xbf16>
    %c0_30 = arith.constant 0 : index
    %c0_31 = arith.constant 0 : index
    %28 = vector.load %arg9[%c0_30, %c0_31] : memref<144x288xbf16, #tpu.memory_space<vmem>>, vector<144x288xbf16>
    %cst = arith.constant dense<0.000000e+00> : vector<32x288xf32>
    %29 = tpu.matmul %27, %28, %cst {dimension_numbers = #tpu.dot_dimension_numbers<[1], [0], [0], [1], [0, 0, 1, 1], [], []>} : vector<32x144xbf16>, vector<144x288xbf16>, vector<32x288xf32> -> vector<32x288xf32>
    %c0_32 = arith.constant 0 : index
    %c0_33 = arith.constant 0 : index
    %30 = vector.load %arg6[%c0_32, %c0_33] : memref<1x288xf32, #tpu.memory_space<vmem>>, vector<1x288xf32>
    %31 = vector.broadcast %30 : vector<1x288xf32> to vector<32x288xf32>
    %32 = arith.mulf %29, %31 : vector<32x288xf32>
    %cst_34 = arith.constant dense<0.000000e+00> : vector<32xf32>
    %33 = vector.multi_reduction <add>, %32, %cst_34 [1] : vector<32x288xf32> to vector<32xf32>
    %34 = vector.shape_cast %33 : vector<32xf32> to vector<32x1xf32>
    %35 = arith.mulf %32, %29 : vector<32x288xf32>
    %cst_35 = arith.constant dense<0.000000e+00> : vector<32xf32>
    %36 = vector.multi_reduction <add>, %35, %cst_35 [1] : vector<32x288xf32> to vector<32xf32>
    %37 = vector.shape_cast %36 : vector<32xf32> to vector<32x1xf32>
    %38 = tpu.concatenate %34, %37 in 1 : vector<32x1xf32>, vector<32x1xf32> -> vector<32x2xf32>
    %c0_36 = arith.constant 0 : index
    %c0_37 = arith.constant 0 : index
    %39 = vector.load %arg7[%c0_36, %c0_37] : memref<32x32xf32, #tpu.memory_space<vmem>>, vector<32x32xf32>
    %cst_38 = arith.constant dense<0.000000e+00> : vector<32x2xf32>
    %40 = tpu.matmul %39, %38, %cst_38 {dimension_numbers = #tpu.dot_dimension_numbers<[1], [0], [0], [1], [0, 0, 1, 1], [], []>} : vector<32x32xf32>, vector<32x2xf32>, vector<32x2xf32> -> vector<32x2xf32>
    %41 = vector.extract_strided_slice %40 {offsets = [0, 0], sizes = [32, 1], strides = [1, 1]} : vector<32x2xf32> to vector<32x1xf32>
    %42 = vector.extract_strided_slice %40 {offsets = [0, 1], sizes = [32, 1], strides = [1, 1]} : vector<32x2xf32> to vector<32x1xf32>
    %43 = arith.mulf %41, %41 : vector<32x1xf32>
    %44 = arith.subf %42, %43 : vector<32x1xf32>
    %cst_39 = arith.constant 0.000000e+00 : f32
    %45 = vector.broadcast %cst_39 : f32 to vector<32x1xf32>
    %46 = arith.maximumf %44, %45 : vector<32x1xf32>
    %47 = vector.broadcast %41 : vector<32x1xf32> to vector<32x288xf32>
    %48 = arith.subf %29, %47 : vector<32x288xf32>
    %cst_40 = arith.constant 9.99999974E-6 : f32
    %49 = vector.broadcast %cst_40 : f32 to vector<32x1xf32>
    %50 = arith.addf %46, %49 : vector<32x1xf32>
    %51 = math.rsqrt %50 : vector<32x1xf32>
    %52 = vector.broadcast %51 : vector<32x1xf32> to vector<32x288xf32>
    %53 = arith.mulf %48, %52 : vector<32x288xf32>
    %c0_41 = arith.constant 0 : index
    %c0_42 = arith.constant 0 : index
    %54 = vector.load %arg4[%c0_41, %c0_42] : memref<32x1xf32, #tpu.memory_space<vmem>>, vector<32x1xf32>
    %55 = vector.broadcast %54 : vector<32x1xf32> to vector<32x288xf32>
    %56 = arith.mulf %53, %55 : vector<32x288xf32>
    %c0_43 = arith.constant 0 : index
    %c0_44 = arith.constant 0 : index
    %57 = vector.load %arg5[%c0_43, %c0_44] : memref<32x1xf32, #tpu.memory_space<vmem>>, vector<32x1xf32>
    %58 = vector.broadcast %57 : vector<32x1xf32> to vector<32x288xf32>
    %59 = arith.addf %56, %58 : vector<32x288xf32>
    %cst_45 = arith.constant 0.000000e+00 : f32
    %60 = vector.broadcast %cst_45 : f32 to vector<32x288xf32>
    %61 = arith.maximumf %59, %60 : vector<32x288xf32>
    %c0_46 = arith.constant 0 : index
    %c0_47 = arith.constant 0 : index
    %c0_48 = arith.constant 0 : index
    %62 = vector.load %arg8[%c0_46, %c0_47, %c0_48] : memref<1x32x288xf32, #tpu.memory_space<vmem>>, vector<1x32x288xf32>
    %63 = vector.shape_cast %62 : vector<1x32x288xf32> to vector<32x288xf32>
    %64 = vector.shape_cast %61 : vector<32x288xf32> to vector<1x32x288xf32>
    tpu.vector_store %arg8[%c0_46, %c0_47, %c0_48], %64 {strides = array<i32>} : memref<1x32x288xf32, #tpu.memory_space<vmem>>, vector<1x32x288xf32>,
    return
  }
  func.func @transform_0(%arg0: i32, %arg1: i32) -> (i32, i32, i32) {
    %c0_i32 = arith.constant 0 : i32
    %c0_i32_0 = arith.constant 0 : i32
    %c0_i32_1 = arith.constant 0 : i32
    return %arg0, %c0_i32, %c0_i32_0 : i32, i32, i32
  }
  func.func @transform_1(%arg0: i32, %arg1: i32) -> (i32, i32) {
    %c0_i32 = arith.constant 0 : i32
    %c0_i32_0 = arith.constant 0 : i32
    return %arg1, %c0_i32 : i32, i32
  }
  func.func @transform_2(%arg0: i32, %arg1: i32) -> (i32, i32) {
    %c0_i32 = arith.constant 0 : i32
    %c0_i32_0 = arith.constant 0 : i32
    return %arg1, %c0_i32 : i32, i32
  }
  func.func @transform_3(%arg0: i32, %arg1: i32) -> (i32, i32) {
    %c0_i32 = arith.constant 0 : i32
    %c0_i32_0 = arith.constant 0 : i32
    return %arg1, %c0_i32 : i32, i32
  }
  func.func @transform_4(%arg0: i32, %arg1: i32) -> (i32, i32) {
    %c0_i32 = arith.constant 0 : i32
    %c0_i32_0 = arith.constant 0 : i32
    %c0_i32_1 = arith.constant 0 : i32
    return %c0_i32, %c0_i32_0 : i32, i32
  }
  func.func @transform_5(%arg0: i32, %arg1: i32) -> (i32, i32) {
    %c0_i32 = arith.constant 0 : i32
    %c0_i32_0 = arith.constant 0 : i32
    %c0_i32_1 = arith.constant 0 : i32
    return %c0_i32, %c0_i32_0 : i32, i32
  }
  func.func @transform_6(%arg0: i32, %arg1: i32) -> (i32, i32, i32) {
    %c0_i32 = arith.constant 0 : i32
    %c0_i32_0 = arith.constant 0 : i32
    return %arg0, %arg1, %c0_i32 : i32, i32, i32
  }
}

</mosaic_0001>

<llo_original>
// kernel: tpu_custom_call.1
$region0: #{tpu_custom_call.1}
  #allocation0 [shape = 'u32[]', space=smem, size = 0x4, offset = 0x4, fixed_abs, tag = 'smem constant byte address 0x4 - core index']
  #allocation1 [shape = 'u32[72,128]{1,0:T(1,128)}', space=vmem, size = 0x9000, scoped, tag = 'internal scratch']
  #allocation2 [shape = 'bf16[144,288]{1,0:T(8,128)(2,1)}', space=vmem, size = 0x1b000, scoped, tag = 'scratch operand']
  %s0 = inlined_call_operand.vmem [shape: bf16[2,16,342], index: 0, kind: input, shape index: {}]
  %s1 = inlined_call_operand.hbm [shape: bf16[32,144], index: 1, kind: input, shape index: {}]
  %s2 = inlined_call_operand.vmem [shape: f32[32,1], index: 2, kind: input, shape index: {}]
  %s3 = inlined_call_operand.vmem [shape: f32[32,1], index: 3, kind: input, shape index: {}]
  %s4 = inlined_call_operand.vmem [shape: f32[1,288], index: 4, kind: input, shape index: {}]
  %s5 = inlined_call_operand.hbm [shape: f32[32,32], index: 5, kind: input, shape index: {}]
  %s6 = inlined_call_operand.hbm [shape: f32[2,32,288], index: 6, kind: output, shape index: {}]
  %s7 = sld [smem:[#allocation0]]
  $region65: #{tpu_custom_call.1} parent=0
    _
  %s9 = ssub.s32 1, %s7
  %s10 = scalar_select 0, %s9, %s7
  $region1: #{tpu_custom_call.1} parent=0
    #allocation3 [shape = 'u8[16384]{0}', space=vmem, size = 0x4000, scoped, tag = 'input window, operand 1, single buffered']
    #allocation4 [shape = 's32[2]{0}', space=sflag, size = 0x8, scoped, tag = 'scoped memory for tpu_custom_call.1']
    #allocation5 [shape = 's32[2]{0}', space=sflag, size = 0x8, scoped, tag = 'scoped memory for tpu_custom_call.1']
    #allocation6 [shape = 'u8[16384]{0}', space=vmem, size = 0x4000, scoped, tag = 'input window, operand 5, single buffered']
    #allocation7 [shape = 's32[1]{0}', space=sflag, size = 0x4, scoped, tag = 'scoped memory for tpu_custom_call.1']
    #allocation8 [shape = 'u8[98304]{0}', space=vmem, size = 0x18000, scoped, tag = 'output window, operand 0']
    %11 = vsyncpa [#allocation4], 0
    %12 = vsyncpa [#allocation7], 0
    %13 = vsyncpa [#allocation5], 0
    %s14 = scalar_lea.sflag [#allocation5], 1
    %15 = vsyncpa %s14, 0
    loop: start=0, step=1, limit=4
    $region2: #{tpu_custom_call.1} parent=1 // loop_pre_header
      _
    $region3: #{tpu_custom_call.1} parent=1 // loop_header
      %s17 = sphi 0, %s21
      %p18 = scmp.ge.s32.totalorder %s17, 4
      %s24 = sphi 0, %s36
      %s25 = sphi 0, %s32
      %s26 = sphi 0, %s24
      %s27 = sphi 0, %s25
      %s28 = sphi 0, %s26
      %s29 = sphi 0, %s27
      %s39 = sphi 0, %s41
      %s42 = sphi 0, %s39
      %s43 = sphi 0, %s42
      %s59 = sphi 0, %s43
      %s65 = sphi 0, %s67
      %s68 = sphi 0, %s65
      %s69 = sphi 0, %s68
      %s85 = sphi 0, %s69
      %s91 = sphi 0, %s93
      %s94 = sphi 0, %s91
      %s95 = sphi 0, %s94
      %s111 = sphi 0, %s95
      %s117 = sphi 0, %s119
      %s120 = sphi 0, %s117
      %s121 = sphi 0, %s120
      %s137 = sphi 0, %s121
      %s141 = sphi 0, %s141
      %s143 = sphi 0, %s141
      %s144 = sphi 0, %s143
      %s158 = sphi 0, %s144
      %s162 = sphi 0, %s162
      %s164 = sphi 0, %s162
      %s165 = sphi 0, %s164
      %s179 = sphi 0, %s165
      %s187 = sphi 0, %s189
      %s190 = sphi 0, %s187
      %s191 = sphi 0, %s190
      %s207 = sphi 0, %s191
    $region4: #{tpu_custom_call.1} parent=1 // loop_header_branch
      %20 = sbr.rel (%p18) target = $region8
    $region5: #{tpu_custom_call.1} parent=1 // loop_body
      %s22 = ssub.s32 %s17, 1
      %s23 = ssub.s32 %s17, 2
      %s30 = sadd.s32 1, %s25
      %p31 = scmp.ge.s32.totalorder %s30, 1
      %s32 = scalar_select %p31, 0, %s30
      %s33 = sadd.s32 1, %s24
      %s34 = scalar_select %p31, %s33, %s24
      %p35 = scmp.ge.s32.totalorder %s34, 2
      %s36 = scalar_select %p35, 0, %s34
      %s37 = ssub.s32 %s24, %s36
      %p38 = scmp.eq.s32.totalorder %s37, 0
      %s40 = sadd.s32 %s39, 1
      %s41 = scalar_select %p38, %s39, %s40
      %p44 = pneg %p38
      %p45 = scmp.eq.s32.totalorder %s17, 1
      %p46 = por %p44, %p45
      %p47 = scmp.ne.s32.totalorder %s39, %s42
      %p48 = scmp.eq.s32.totalorder %s17, 0
      %p49 = por %p47, %p48
      %p50 = scmp.ne.s32.totalorder %s39, %s42
      %p51 = scmp.eq.s32.totalorder %s22, 1
      %p52 = por %p50, %p51
      %p53 = scmp.ne.s32.totalorder %s42, %s43
      %p54 = scmp.eq.s32.totalorder %s22, 0
      %p55 = por %p53, %p54
      %p56 = scmp.ne.s32.totalorder %s42, %s43
      %p57 = scmp.eq.s32.totalorder %s23, 1
      %p58 = por %p56, %p57
      %p60 = scmp.ne.s32.totalorder %s43, %s59
      %p61 = scmp.eq.s32.totalorder %s23, 0
      %p62 = por %p60, %p61
      %s63 = ssub.s32 %s25, %s32
      %p64 = scmp.eq.s32.totalorder %s63, 0
      %s66 = sadd.s32 %s65, 1
      %s67 = scalar_select %p64, %s65, %s66
      %p70 = pneg %p64
      %p71 = scmp.eq.s32.totalorder %s17, 1
      %p72 = por %p70, %p71
      %p73 = scmp.ne.s32.totalorder %s65, %s68
      %p74 = scmp.eq.s32.totalorder %s17, 0
      %p75 = por %p73, %p74
      %p76 = scmp.ne.s32.totalorder %s65, %s68
      %p77 = scmp.eq.s32.totalorder %s22, 1
      %p78 = por %p76, %p77
      %p79 = scmp.ne.s32.totalorder %s68, %s69
      %p80 = scmp.eq.s32.totalorder %s22, 0
      %p81 = por %p79, %p80
      %p82 = scmp.ne.s32.totalorder %s68, %s69
      %p83 = scmp.eq.s32.totalorder %s23, 1
      %p84 = por %p82, %p83
      %p86 = scmp.ne.s32.totalorder %s69, %s85
      %p87 = scmp.eq.s32.totalorder %s23, 0
      %p88 = por %p86, %p87
      %s89 = ssub.s32 %s25, %s32
      %p90 = scmp.eq.s32.totalorder %s89, 0
      %s92 = sadd.s32 %s91, 1
      %s93 = scalar_select %p90, %s91, %s92
      %p96 = pneg %p90
      %p97 = scmp.eq.s32.totalorder %s17, 1
      %p98 = por %p96, %p97
      %p99 = scmp.ne.s32.totalorder %s91, %s94
      %p100 = scmp.eq.s32.totalorder %s17, 0
      %p101 = por %p99, %p100
      %p102 = scmp.ne.s32.totalorder %s91, %s94
      %p103 = scmp.eq.s32.totalorder %s22, 1
      %p104 = por %p102, %p103
      %p105 = scmp.ne.s32.totalorder %s94, %s95
      %p106 = scmp.eq.s32.totalorder %s22, 0
      %p107 = por %p105, %p106
      %p108 = scmp.ne.s32.totalorder %s94, %s95
      %p109 = scmp.eq.s32.totalorder %s23, 1
      %p110 = por %p108, %p109
      %p112 = scmp.ne.s32.totalorder %s95, %s111
      %p113 = scmp.eq.s32.totalorder %s23, 0
      %p114 = por %p112, %p113
      %s115 = ssub.s32 %s25, %s32
      %p116 = scmp.eq.s32.totalorder %s115, 0
      %s118 = sadd.s32 %s117, 1
      %s119 = scalar_select %p116, %s117, %s118
      %p122 = pneg %p116
      %p123 = scmp.eq.s32.totalorder %s17, 1
      %p124 = por %p122, %p123
      %p125 = scmp.ne.s32.totalorder %s117, %s120
      %p126 = scmp.eq.s32.totalorder %s17, 0
      %p127 = por %p125, %p126
      %p128 = scmp.ne.s32.totalorder %s117, %s120
      %p129 = scmp.eq.s32.totalorder %s22, 1
      %p130 = por %p128, %p129
      %p131 = scmp.ne.s32.totalorder %s120, %s121
      %p132 = scmp.eq.s32.totalorder %s22, 0
      %p133 = por %p131, %p132
      %p134 = scmp.ne.s32.totalorder %s120, %s121
      %p135 = scmp.eq.s32.totalorder %s23, 1
      %p136 = por %p134, %p135
      %p138 = scmp.ne.s32.totalorder %s121, %s137
      %p139 = scmp.eq.s32.totalorder %s23, 0
      %p140 = por %p138, %p139
      %s142 = sadd.s32 %s141, 1
      %p145 = scmp.eq.s32.totalorder %s17, 1
      %p146 = scmp.ne.s32.totalorder %s141, %s143
      %p147 = scmp.eq.s32.totalorder %s17, 0
      %p148 = por %p146, %p147
      %p149 = scmp.ne.s32.totalorder %s141, %s143
      %p150 = scmp.eq.s32.totalorder %s22, 1
      %p151 = por %p149, %p150
      %p152 = scmp.ne.s32.totalorder %s143, %s144
      %p153 = scmp.eq.s32.totalorder %s22, 0
      %p154 = por %p152, %p153
      %p155 = scmp.ne.s32.totalorder %s143, %s144
      %p156 = scmp.eq.s32.totalorder %s23, 1
      %p157 = por %p155, %p156
      %p159 = scmp.ne.s32.totalorder %s144, %s158
      %p160 = scmp.eq.s32.totalorder %s23, 0
      %p161 = por %p159, %p160
      %s163 = sadd.s32 %s162, 1
      %p166 = scmp.eq.s32.totalorder %s17, 1
      %p167 = scmp.ne.s32.totalorder %s162, %s164
      %p168 = scmp.eq.s32.totalorder %s17, 0
      %p169 = por %p167, %p168
      %p170 = scmp.ne.s32.totalorder %s162, %s164
      %p171 = scmp.eq.s32.totalorder %s22, 1
      %p172 = por %p170, %p171
      %p173 = scmp.ne.s32.totalorder %s164, %s165
      %p174 = scmp.eq.s32.totalorder %s22, 0
      %p175 = por %p173, %p174
      %p176 = scmp.ne.s32.totalorder %s164, %s165
      %p177 = scmp.eq.s32.totalorder %s23, 1
      %p178 = por %p176, %p177
      %p180 = scmp.ne.s32.totalorder %s165, %s179
      %p181 = scmp.eq.s32.totalorder %s23, 0
      %p182 = por %p180, %p181
      %s183 = ssub.s32 %s24, %s36
      %s184 = ssub.s32 %s25, %s32
      %s185 = sor.u32 %s183, %s184
      %p186 = scmp.eq.s32.totalorder %s185, 0
      %s188 = sadd.s32 %s187, 1
      %s189 = scalar_select %p186, %s187, %s188
      %p192 = pneg %p186
      %p193 = scmp.eq.s32.totalorder %s17, 1
      %p194 = por %p192, %p193
      %p195 = scmp.ne.s32.totalorder %s187, %s190
      %p196 = scmp.eq.s32.totalorder %s17, 0
      %p197 = por %p195, %p196
      %p198 = scmp.ne.s32.totalorder %s187, %s190
      %p199 = scmp.eq.s32.totalorder %s22, 1
      %p200 = por %p198, %p199
      %p201 = scmp.ne.s32.totalorder %s190, %s191
      %p202 = scmp.eq.s32.totalorder %s22, 0
      %p203 = por %p201, %p202
      %p204 = scmp.ne.s32.totalorder %s190, %s191
      %p205 = scmp.eq.s32.totalorder %s23, 1
      %p206 = por %p204, %p205
      %p208 = scmp.ne.s32.totalorder %s191, %s207
      %p209 = scmp.eq.s32.totalorder %s23, 0
      %p210 = por %p208, %p209
      %p211 = scmp.le.s32.totalorder 1, %s17
      %p212 = scmp.lt.s32.totalorder %s17, 3
      %p213 = pnand %p211, %p212
      %p214 = pneg %p213
      // Predicated region
      $region9: #{tpu_custom_call.1} parent=5 // pred_check
        _
      $region10: #{tpu_custom_call.1} parent=5 // pred_check_branch
        %216 = sbr.rel (%p213) target = $region12
      $region11: #{tpu_custom_call.1} parent=5 // pred_region
        %s217 = ssub.s32 %s17, 1
        // Predicated region
        $region13: #{tpu_custom_call.1} parent=11 // pred_check
          %p218 = pneg %p81
        $region14: #{tpu_custom_call.1} parent=11 // pred_check_branch
          %220 = sbr.rel (%p218) target = $region16
        $region15: #{tpu_custom_call.1} parent=11 // pred_region
          %s221 = smul.u32 4, %s27
          %223 = vsyncadd [#allocation4], 0
          %s224 = smul.addr %s221, 2
          %s225 = smul.addr %s224, 4
          %s226 = scalar_lea.hbm %s1, %s225
          %s227 = sshll.u32 %s226, 4
          %s228 = int_to_ptr.hbm [resolvable:$true] %s227
          %s229 = sshll.u32 [#allocation3], 4
          %s230 = int_to_ptr.vmem [resolvable:$true] %s229
          %235 = dma.hbm_to_vmem [thread:$0]  %s228, 512, %s230, [#allocation4], 128, 128, 8
        $region16: #{tpu_custom_call.1} parent=11 // pred_fallthru
          _
        // Predicated region
        $region17: #{tpu_custom_call.1} parent=11 // pred_check
          %p236 = pneg %p107
        $region18: #{tpu_custom_call.1} parent=11 // pred_check_branch
          %238 = sbr.rel (%p236) target = $region20
        $region19: #{tpu_custom_call.1} parent=11 // pred_region
          %s239 = smul.u32 4, %s27
          %p240 = scmp.lt.s32.totalorder %s239, 3
          %s241 = scalar_select %p240, %s239, 3
          %s242 = smul.addr %s241, 8
          %s243 = scalar_lea.vmem %s2, %s242
          %s244 = smul.u32 4, %s27
        $region20: #{tpu_custom_call.1} parent=11 // pred_fallthru
          _
        // Predicated region
        $region21: #{tpu_custom_call.1} parent=11 // pred_check
          %p245 = pneg %p133
        $region22: #{tpu_custom_call.1} parent=11 // pred_check_branch
          %247 = sbr.rel (%p245) target = $region24
        $region23: #{tpu_custom_call.1} parent=11 // pred_region
          %s248 = smul.u32 4, %s27
          %p249 = scmp.lt.s32.totalorder %s248, 3
          %s250 = scalar_select %p249, %s248, 3
          %s251 = smul.addr %s250, 8
          %s252 = scalar_lea.vmem %s3, %s251
          %s253 = smul.u32 4, %s27
        $region24: #{tpu_custom_call.1} parent=11 // pred_fallthru
          _
        // Predicated region
        $region25: #{tpu_custom_call.1} parent=11 // pred_check
          %p254 = pneg %p154
        $region26: #{tpu_custom_call.1} parent=11 // pred_check_branch
          %256 = sbr.rel (%p254) target = $region28
        $region27: #{tpu_custom_call.1} parent=11 // pred_region
          _
        $region28: #{tpu_custom_call.1} parent=11 // pred_fallthru
          _
        // Predicated region
        $region29: #{tpu_custom_call.1} parent=11 // pred_check
          %p257 = pneg %p175
        $region30: #{tpu_custom_call.1} parent=11 // pred_check_branch
          %259 = sbr.rel (%p257) target = $region32
        $region31: #{tpu_custom_call.1} parent=11 // pred_region
          %261 = vsyncadd [#allocation7], 0
          %s262 = sshll.u32 %s5, 4
          %s263 = int_to_ptr.hbm [resolvable:$true] %s262
          %s264 = sshll.u32 [#allocation6], 4
          %s265 = int_to_ptr.vmem [resolvable:$true] %s264
          %270 = dma.hbm_to_vmem [thread:$0]  %s263, 512, %s265, [#allocation7], 128, 128, 8
        $region32: #{tpu_custom_call.1} parent=11 // pred_fallthru
          _
      $region12: #{tpu_custom_call.1} parent=5 // pred_fallthru
        _
      %p271 = scmp.lt.s32.totalorder %s17, 2
      // Predicated region
      $region33: #{tpu_custom_call.1} parent=5 // pred_check
        %p272 = pneg %p271
      $region34: #{tpu_custom_call.1} parent=5 // pred_check_branch
        %274 = sbr.rel (%p272) target = $region36
      $region35: #{tpu_custom_call.1} parent=5 // pred_region
        // Predicated region
        $region37: #{tpu_custom_call.1} parent=35 // pred_check
          %p275 = pneg %p49
        $region38: #{tpu_custom_call.1} parent=35 // pred_check_branch
          %277 = sbr.rel (%p275) target = $region40
        $region39: #{tpu_custom_call.1} parent=35 // pred_region
          %p278 = scmp.lt.s32.totalorder %s24, 1
          %s279 = scalar_select %p278, %s24, 1
          %s280 = smul.addr %s279, 6
          %s281 = smul.addr %s280, 4
          %s282 = scalar_lea.vmem %s0, %s281
        $region40: #{tpu_custom_call.1} parent=35 // pred_fallthru
          _
      $region36: #{tpu_custom_call.1} parent=5 // pred_fallthru
        _
      %p283 = scmp.le.s32.totalorder 1, %s17
      %p284 = scmp.lt.s32.totalorder %s17, 3
      %p285 = pnand %p283, %p284
      %p286 = pneg %p285
      // Predicated region
      $region41: #{tpu_custom_call.1} parent=5 // pred_check
        _
      $region42: #{tpu_custom_call.1} parent=5 // pred_check_branch
        %288 = sbr.rel (%p285) target = $region44
      $region43: #{tpu_custom_call.1} parent=5 // pred_region
        %s289 = ssub.s32 %s17, 1
        // Predicated region
        $region45: #{tpu_custom_call.1} parent=43 // pred_check
          %p290 = pneg %p81
        $region46: #{tpu_custom_call.1} parent=43 // pred_check_branch
          %292 = sbr.rel (%p290) target = $region48
        $region47: #{tpu_custom_call.1} parent=43 // pred_region
          %294 = dma.done [#allocation4], 512
        $region48: #{tpu_custom_call.1} parent=43 // pred_fallthru
          _
        // Predicated region
        $region49: #{tpu_custom_call.1} parent=43 // pred_check
          %p295 = pneg %p175
        $region50: #{tpu_custom_call.1} parent=43 // pred_check_branch
          %297 = sbr.rel (%p295) target = $region52
        $region51: #{tpu_custom_call.1} parent=43 // pred_region
          %299 = dma.done [#allocation7], 512
        $region52: #{tpu_custom_call.1} parent=43 // pred_fallthru
          _
        %p300 = scmp.lt.s32.totalorder %s26, 1
        %s301 = scalar_select %p300, %s26, 1
        %s302 = smul.addr %s301, 6
        %s303 = smul.addr %s302, 4
        %s304 = scalar_lea.vmem %s0, %s303
        %p305 = pneg %p55
        %p306 = pneg %p52
        %p307 = pneg %p81
        %p308 = pneg %p78
        %s309 = smul.u32 4, %s27
        %p310 = scmp.lt.s32.totalorder %s309, 3
        %s311 = scalar_select %p310, %s309, 3
        %s312 = smul.addr %s311, 8
        %s313 = scalar_lea.vmem %s2, %s312
        %p314 = pneg %p107
        %p315 = pneg %p104
        %s316 = smul.u32 4, %s27
        %p317 = scmp.lt.s32.totalorder %s316, 3
        %s318 = scalar_select %p317, %s316, 3
        %s319 = smul.addr %s318, 8
        %s320 = scalar_lea.vmem %s3, %s319
        %p321 = pneg %p133
        %p322 = pneg %p130
        %p323 = pneg %p154
        %p324 = pneg %p151
        %p325 = pneg %p175
        %p326 = pneg %p172
        %p327 = pneg %p203
        %p328 = pneg %p200
        %s329 = sand.u32 %s190, 1
        %s330 = scalar_lea.sflag [#allocation5], %s329
        %s331 = sand.u32 %s190, 1
        %s332 = smul.addr %s331, 96
        %s333 = scalar_lea.vmem [#allocation8], %s332
        %p334 = scmp.lt.s32.totalorder %s26, 1
        %s335 = scalar_select %p334, %s26, 1
        %s336 = smul.addr %s335, 6
        %s337 = smul.addr %s336, 4
        %s338 = scalar_lea.vmem %s0, %s337
        %s339 = smul.u32 4, %s27
        %s340 = smul.u32 4, %s27
        %p341 = scmp.lt.s32.totalorder %s340, 3
        %s342 = scalar_select %p341, %s340, 3
        %s343 = smul.addr %s342, 8
        %s344 = scalar_lea.vmem %s2, %s343
        %s345 = smul.u32 4, %s27
        %s346 = smul.u32 4, %s27
        %p347 = scmp.lt.s32.totalorder %s346, 3
        %s348 = scalar_select %p347, %s346, 3
        %s349 = smul.addr %s348, 8
        %s350 = scalar_lea.vmem %s3, %s349
        %s351 = smul.u32 4, %s27
        %s352 = smul.u32 4, %s27
        %v354 = vld [vmem:[%s338] sm:$0xff]
        %v355 = vld [vmem:[%s338 + $0x8] sm:$0xf]
        %v356 = vld [vmem:[%s338 + $0xc] sm:$0xff]
        %v357 = vld [vmem:[%s338 + $0x14] sm:$0xf]
        %358 = vst [vmem:[#allocation2] sm:$0xff] %v354
        %vm359 = vcmask 257024
        %360 = vst.msk [vmem:[#allocation2 + $0x8] sm:$0xf] %vm359, %v355
        %361 = vst [vmem:[#allocation2 + $0xc] sm:$0xff] %v356
        %362 = vst.msk [vmem:[#allocation2 + $0x14] sm:$0xf] %vm359, %v357
        %v363 = vld [vmem:[%s338] sm:$0xff]
        %v364 = vld [vmem:[%s338 + $0x8] sm:$0xf]
        %v365 = vld [vmem:[%s338 + $0xc] sm:$0xff]
        %v366 = vld [vmem:[%s338 + $0x14] sm:$0xf]
        %371 = vrot.lane.b32.xlu0 %v363, 127
        %v372 = vpop.permute.xlu0 %371
        %373 = vrot.lane.b32.xlu0 %v364, 127
        %v374 = vpop.permute.xlu0 %373
        %375 = vrot.lane.b32.xlu0 %v365, 127
        %v376 = vpop.permute.xlu0 %375
        %377 = vrot.lane.b32.xlu0 %v366, 127
        %v378 = vpop.permute.xlu0 %377
        %v379 = vrot.slane %v372, 4
        %v380 = vrot.slane %v374, 4
        %v381 = vrot.slane %v376, 4
        %v382 = vrot.slane %v378, 4
        %vm383 = vcmask 1043456
        %v384 = vsel %vm383, %v379, %v380
        %vm385 = vcmask 1039360
        %v386 = vsel %vm385, %v372, %v384
        %v387 = vsel %vm383, %v381, %v382
        %v388 = vsel %vm385, %v376, %v387
        %393 = vst [vmem:[#allocation2 + $0x18] sm:$0xff] %v386
        %394 = vst.msk [vmem:[#allocation2 + $0x20] sm:$0xf] %vm359, %v374
        %395 = vst [vmem:[#allocation2 + $0x24] sm:$0xff] %v388
        %396 = vst.msk [vmem:[#allocation2 + $0x2c] sm:$0xf] %vm359, %v378
        %v397 = vld [vmem:[%s338] sm:$0xff]
        %v398 = vld [vmem:[%s338 + $0x8] sm:$0xf]
        %v399 = vld [vmem:[%s338 + $0xc] sm:$0xff]
        %v400 = vld [vmem:[%s338 + $0x14] sm:$0xf]
        %405 = vrot.lane.b32.xlu0 %v397, 126
        %v406 = vpop.permute.xlu0 %405
        %407 = vrot.lane.b32.xlu0 %v398, 126
        %v408 = vpop.permute.xlu0 %407
        %409 = vrot.lane.b32.xlu0 %v399, 126
        %v410 = vpop.permute.xlu0 %409
        %411 = vrot.lane.b32.xlu0 %v400, 126
        %v412 = vpop.permute.xlu0 %411
        %v413 = vrot.slane %v406, 4
        %v414 = vrot.slane %v408, 4
        %v415 = vrot.slane %v410, 4
        %v416 = vrot.slane %v412, 4
        %v417 = vsel %vm383, %v413, %v414
        %vm418 = vcmask 1031168
        %v419 = vsel %vm418, %v406, %v417
        %v420 = vsel %vm383, %v415, %v416
        %v421 = vsel %vm418, %v410, %v420
        %426 = vst [vmem:[#allocation2 + $0x30] sm:$0xff] %v419
        %427 = vst.msk [vmem:[#allocation2 + $0x38] sm:$0xf] %vm359, %v408
        %428 = vst [vmem:[#allocation2 + $0x3c] sm:$0xff] %v421
        %429 = vst.msk [vmem:[#allocation2 + $0x44] sm:$0xf] %vm359, %v412
        %v430 = vld [vmem:[%s338] sm:$0xff]
        %v431 = vld [vmem:[%s338 + $0x8] sm:$0xf]
        %v432 = vld [vmem:[%s338 + $0xc] sm:$0xff]
        %v433 = vld [vmem:[%s338 + $0x14] sm:$0xf]
        %438 = vrot.lane.b32.xlu0 %v430, 110
        %v439 = vpop.permute.xlu0 %438
        %440 = vrot.lane.b32.xlu0 %v431, 110
        %v441 = vpop.permute.xlu0 %440
        %442 = vrot.lane.b32.xlu0 %v432, 110
        %v443 = vpop.permute.xlu0 %442
        %444 = vrot.lane.b32.xlu0 %v433, 110
        %v445 = vpop.permute.xlu0 %444
        %v446 = vrot.slane %v439, 4
        %v447 = vrot.slane %v441, 4
        %v448 = vrot.slane %v443, 4
        %v449 = vrot.slane %v445, 4
        %v450 = vsel %vm383, %v446, %v447
        %vm451 = vcmask 900096
        %v452 = vsel %vm451, %v439, %v450
        %v453 = vsel %vm383, %v448, %v449
        %v454 = vsel %vm451, %v443, %v453
        %459 = vst [vmem:[#allocation2 + $0x48] sm:$0xff] %v452
        %460 = vst.msk [vmem:[#allocation2 + $0x50] sm:$0xf] %vm359, %v441
        %461 = vst [vmem:[#allocation2 + $0x54] sm:$0xff] %v454
        %462 = vst.msk [vmem:[#allocation2 + $0x5c] sm:$0xf] %vm359, %v445
        %v463 = vld [vmem:[%s338] sm:$0xff]
        %v464 = vld [vmem:[%s338 + $0x8] sm:$0xf]
        %v465 = vld [vmem:[%s338 + $0xc] sm:$0xff]
        %v466 = vld [vmem:[%s338 + $0x14] sm:$0xf]
        %471 = vrot.lane.b32.xlu0 %v463, 109
        %v472 = vpop.permute.xlu0 %471
        %473 = vrot.lane.b32.xlu0 %v464, 109
        %v474 = vpop.permute.xlu0 %473
        %475 = vrot.lane.b32.xlu0 %v465, 109
        %v476 = vpop.permute.xlu0 %475
        %477 = vrot.lane.b32.xlu0 %v466, 109
        %v478 = vpop.permute.xlu0 %477
        %v479 = vrot.slane %v472, 4
        %v480 = vrot.slane %v474, 4
        %v481 = vrot.slane %v476, 4
        %v482 = vrot.slane %v478, 4
        %v483 = vsel %vm383, %v479, %v480
        %vm484 = vcmask 891904
        %v485 = vsel %vm484, %v472, %v483
        %v486 = vsel %vm383, %v481, %v482
        %v487 = vsel %vm484, %v476, %v486
        %492 = vst [vmem:[#allocation2 + $0x60] sm:$0xff] %v485
        %493 = vst.msk [vmem:[#allocation2 + $0x68] sm:$0xf] %vm359, %v474
        %494 = vst [vmem:[#allocation2 + $0x6c] sm:$0xff] %v487
        %495 = vst.msk [vmem:[#allocation2 + $0x74] sm:$0xf] %vm359, %v478
        %v496 = vld [vmem:[%s338] sm:$0xff]
        %v497 = vld [vmem:[%s338 + $0x8] sm:$0xf]
        %v498 = vld [vmem:[%s338 + $0xc] sm:$0xff]
        %v499 = vld [vmem:[%s338 + $0x14] sm:$0xf]
        %504 = vrot.lane.b32.xlu0 %v496, 108
        %v505 = vpop.permute.xlu0 %504
        %506 = vrot.lane.b32.xlu0 %v497, 108
        %v507 = vpop.permute.xlu0 %506
        %508 = vrot.lane.b32.xlu0 %v498, 108
        %v509 = vpop.permute.xlu0 %508
        %510 = vrot.lane.b32.xlu0 %v499, 108
        %v511 = vpop.permute.xlu0 %510
        %v512 = vrot.slane %v505, 4
        %v513 = vrot.slane %v507, 4
        %v514 = vrot.slane %v509, 4
        %v515 = vrot.slane %v511, 4
        %v516 = vsel %vm383, %v512, %v513
        %vm517 = vcmask 883712
        %v518 = vsel %vm517, %v505, %v516
        %v519 = vsel %vm383, %v514, %v515
        %v520 = vsel %vm517, %v509, %v519
        %525 = vst [vmem:[#allocation2 + $0x78] sm:$0xff] %v518
        %526 = vst.msk [vmem:[#allocation2 + $0x80] sm:$0xf] %vm359, %v507
        %527 = vst [vmem:[#allocation2 + $0x84] sm:$0xff] %v520
        %528 = vst.msk [vmem:[#allocation2 + $0x8c] sm:$0xf] %vm359, %v511
        %v529 = vld [vmem:[%s338] sm:$0xff]
        %v530 = vld [vmem:[%s338 + $0x8] sm:$0xf]
        %v531 = vld [vmem:[%s338 + $0xc] sm:$0xff]
        %v532 = vld [vmem:[%s338 + $0x14] sm:$0xf]
        %537 = vrot.lane.b32.xlu0 %v529, 92
        %v538 = vpop.permute.xlu0 %537
        %539 = vrot.lane.b32.xlu0 %v530, 92
        %v540 = vpop.permute.xlu0 %539
        %541 = vrot.lane.b32.xlu0 %v531, 92
        %v542 = vpop.permute.xlu0 %541
        %543 = vrot.lane.b32.xlu0 %v532, 92
        %v544 = vpop.permute.xlu0 %543
        %v545 = vrot.slane %v538, 4
        %v546 = vrot.slane %v540, 4
        %v547 = vrot.slane %v542, 4
        %v548 = vrot.slane %v544, 4
        %v549 = vsel %vm383, %v545, %v546
        %vm550 = vcmask 752640
        %v551 = vsel %vm550, %v538, %v549
        %v552 = vsel %vm383, %v547, %v548
        %v553 = vsel %vm550, %v542, %v552
        %558 = vst [vmem:[#allocation2 + $0x90] sm:$0xff] %v551
        %559 = vst.msk [vmem:[#allocation2 + $0x98] sm:$0xf] %vm359, %v540
        %560 = vst [vmem:[#allocation2 + $0x9c] sm:$0xff] %v553
        %561 = vst.msk [vmem:[#allocation2 + $0xa4] sm:$0xf] %vm359, %v544
        %v562 = vld [vmem:[%s338] sm:$0xff]
        %v563 = vld [vmem:[%s338 + $0x8] sm:$0xf]
        %v564 = vld [vmem:[%s338 + $0xc] sm:$0xff]
        %v565 = vld [vmem:[%s338 + $0x14] sm:$0xf]
        %570 = vrot.lane.b32.xlu0 %v562, 91
        %v571 = vpop.permute.xlu0 %570
        %572 = vrot.lane.b32.xlu0 %v563, 91
        %v573 = vpop.permute.xlu0 %572
        %574 = vrot.lane.b32.xlu0 %v564, 91
        %v575 = vpop.permute.xlu0 %574
        %576 = vrot.lane.b32.xlu0 %v565, 91
        %v577 = vpop.permute.xlu0 %576
        %v578 = vrot.slane %v571, 4
        %v579 = vrot.slane %v573, 4
        %v580 = vrot.slane %v575, 4
        %v581 = vrot.slane %v577, 4
        %v582 = vsel %vm383, %v578, %v579
        %vm583 = vcmask 744448
        %v584 = vsel %vm583, %v571, %v582
        %v585 = vsel %vm383, %v580, %v581
        %v586 = vsel %vm583, %v575, %v585
        %591 = vst [vmem:[#allocation2 + $0xa8] sm:$0xff] %v584
        %592 = vst.msk [vmem:[#allocation2 + $0xb0] sm:$0xf] %vm359, %v573
        %593 = vst [vmem:[#allocation2 + $0xb4] sm:$0xff] %v586
        %594 = vst.msk [vmem:[#allocation2 + $0xbc] sm:$0xf] %vm359, %v577
        %v595 = vld [vmem:[%s338] sm:$0xff]
        %v596 = vld [vmem:[%s338 + $0x8] sm:$0xf]
        %v597 = vld [vmem:[%s338 + $0xc] sm:$0xff]
        %v598 = vld [vmem:[%s338 + $0x14] sm:$0xf]
        %603 = vrot.lane.b32.xlu0 %v595, 90
        %v604 = vpop.permute.xlu0 %603
        %605 = vrot.lane.b32.xlu0 %v596, 90
        %v606 = vpop.permute.xlu0 %605
        %607 = vrot.lane.b32.xlu0 %v597, 90
        %v608 = vpop.permute.xlu0 %607
        %609 = vrot.lane.b32.xlu0 %v598, 90
        %v610 = vpop.permute.xlu0 %609
        %v611 = vrot.slane %v604, 4
        %v612 = vrot.slane %v606, 4
        %v613 = vrot.slane %v608, 4
        %v614 = vrot.slane %v610, 4
        %v615 = vsel %vm383, %v611, %v612
        %vm616 = vcmask 736256
        %v617 = vsel %vm616, %v604, %v615
        %v618 = vsel %vm383, %v613, %v614
        %v619 = vsel %vm616, %v608, %v618
        %624 = vst [vmem:[#allocation2 + $0xc0] sm:$0xff] %v617
        %625 = vst.msk [vmem:[#allocation2 + $0xc8] sm:$0xf] %vm359, %v606
        %626 = vst [vmem:[#allocation2 + $0xcc] sm:$0xff] %v619
        %627 = vst.msk [vmem:[#allocation2 + $0xd4] sm:$0xf] %vm359, %v610
        %v628 = vld [vmem:[#allocation3] sm:$0xff]
        %v629 = vld [vmem:[#allocation3 + $0x8] sm:$0xff]
        %v630 = vld [vmem:[#allocation3 + $0x10] sm:$0xff]
        %v631 = vld [vmem:[#allocation3 + $0x18] sm:$0xff]
        %v632 = vld [vmem:[#allocation2] sm:$0xff]
        %v633 = vld [vmem:[#allocation2 + $0x8] sm:$0xf]
        %v634 = vld [vmem:[#allocation2 + $0xc] sm:$0xff]
        %v635 = vld [vmem:[#allocation2 + $0x14] sm:$0xf]
        %v636 = vld [vmem:[#allocation2 + $0x18] sm:$0xff]
        %v637 = vld [vmem:[#allocation2 + $0x20] sm:$0xf]
        %v638 = vld [vmem:[#allocation2 + $0x24] sm:$0xff]
        %v639 = vld [vmem:[#allocation2 + $0x2c] sm:$0xf]
        %v640 = vld [vmem:[#allocation2 + $0x30] sm:$0xff]
        %v641 = vld [vmem:[#allocation2 + $0x38] sm:$0xf]
        %v642 = vld [vmem:[#allocation2 + $0x3c] sm:$0xff]
        %v643 = vld [vmem:[#allocation2 + $0x44] sm:$0xf]
        %v644 = vld [vmem:[#allocation2 + $0x48] sm:$0xff]
        %v645 = vld [vmem:[#allocation2 + $0x50] sm:$0xf]
        %v646 = vld [vmem:[#allocation2 + $0x54] sm:$0xff]
        %v647 = vld [vmem:[#allocation2 + $0x5c] sm:$0xf]
        %v648 = vld [vmem:[#allocation2 + $0x60] sm:$0xff]
        %v649 = vld [vmem:[#allocation2 + $0x68] sm:$0xf]
        %v650 = vld [vmem:[#allocation2 + $0x6c] sm:$0xff]
        %v651 = vld [vmem:[#allocation2 + $0x74] sm:$0xf]
        %v652 = vld [vmem:[#allocation2 + $0x78] sm:$0xff]
        %v653 = vld [vmem:[#allocation2 + $0x80] sm:$0xf]
        %v654 = vld [vmem:[#allocation2 + $0x84] sm:$0xff]
        %v655 = vld [vmem:[#allocation2 + $0x8c] sm:$0xf]
        %v656 = vld [vmem:[#allocation2 + $0x90] sm:$0xff]
        %v657 = vld [vmem:[#allocation2 + $0x98] sm:$0xf]
        %v658 = vld [vmem:[#allocation2 + $0x9c] sm:$0xff]
        %v659 = vld [vmem:[#allocation2 + $0xa4] sm:$0xf]
        %v660 = vld [vmem:[#allocation2 + $0xa8] sm:$0xff]
        %v661 = vld [vmem:[#allocation2 + $0xb0] sm:$0xf]
        %v662 = vld [vmem:[#allocation2 + $0xb4] sm:$0xff]
        %v663 = vld [vmem:[#allocation2 + $0xbc] sm:$0xf]
        %v664 = vld [vmem:[#allocation2 + $0xc0] sm:$0xff]
        %v665 = vld [vmem:[#allocation2 + $0xc8] sm:$0xf]
        %v666 = vld [vmem:[#allocation2 + $0xcc] sm:$0xff]
        %v667 = vld [vmem:[#allocation2 + $0xd4] sm:$0xf]
        %v672 = vunpack.c.l.b16 %v628
        %v673 = vunpack.c.h.b16 %v628
        %v674 = vunpack.c.l.b16 %v629
        %v675 = vunpack.c.h.b16 %v629
        %v676 = vunpack.c.l.b16 %v630
        %v677 = vunpack.c.h.b16 %v630
        %v678 = vunpack.c.l.b16 %v631
        %v679 = vunpack.c.h.b16 %v631
        %v680 = vpack.c.b16 %v674, %v672
        %v681 = vpack.c.b16 %v675, %v673
        %v682 = vpack.c.b16 %v678, %v676
        %v683 = vpack.c.b16 %v679, %v677
        %v722 = vunpack.c.l.b16 %v632
        %v723 = vunpack.c.h.b16 %v632
        %v724 = vunpack.c.l.b16 %v633
        %v725 = vunpack.c.l.b16 %v634
        %v726 = vunpack.c.h.b16 %v634
        %v727 = vunpack.c.l.b16 %v635
        %v728 = vunpack.c.l.b16 %v636
        %v729 = vunpack.c.h.b16 %v636
        %v730 = vunpack.c.l.b16 %v637
        %v731 = vunpack.c.l.b16 %v638
        %v732 = vunpack.c.h.b16 %v638
        %v733 = vunpack.c.l.b16 %v639
        %v734 = vunpack.c.l.b16 %v640
        %v735 = vunpack.c.h.b16 %v640
        %v736 = vunpack.c.l.b16 %v641
        %v737 = vunpack.c.l.b16 %v642
        %v738 = vunpack.c.h.b16 %v642
        %v739 = vunpack.c.l.b16 %v643
        %v740 = vunpack.c.l.b16 %v644
        %v741 = vunpack.c.h.b16 %v644
        %v742 = vunpack.c.l.b16 %v645
        %v743 = vunpack.c.l.b16 %v646
        %v744 = vunpack.c.h.b16 %v646
        %v745 = vunpack.c.l.b16 %v647
        %v746 = vunpack.c.l.b16 %v648
        %v747 = vunpack.c.h.b16 %v648
        %v748 = vunpack.c.l.b16 %v649
        %v749 = vunpack.c.l.b16 %v650
        %v750 = vunpack.c.h.b16 %v650
        %v751 = vunpack.c.l.b16 %v651
        %v752 = vunpack.c.l.b16 %v652
        %v753 = vunpack.c.h.b16 %v652
        %v754 = vunpack.c.l.b16 %v653
        %v755 = vunpack.c.l.b16 %v654
        %v756 = vunpack.c.h.b16 %v654
        %v757 = vunpack.c.l.b16 %v655
        %v758 = vunpack.c.l.b16 %v656
        %v759 = vunpack.c.h.b16 %v656
        %v760 = vunpack.c.l.b16 %v657
        %v761 = vunpack.c.l.b16 %v658
        %v762 = vunpack.c.h.b16 %v658
        %v763 = vunpack.c.l.b16 %v659
        %v764 = vunpack.c.l.b16 %v660
        %v765 = vunpack.c.h.b16 %v660
        %v766 = vunpack.c.l.b16 %v661
        %v767 = vunpack.c.l.b16 %v662
        %v768 = vunpack.c.h.b16 %v662
        %v769 = vunpack.c.l.b16 %v663
        %v770 = vunpack.c.l.b16 %v664
        %v771 = vunpack.c.h.b16 %v664
        %v772 = vunpack.c.l.b16 %v665
        %v773 = vunpack.c.l.b16 %v666
        %v774 = vunpack.c.h.b16 %v666
        %v775 = vunpack.c.l.b16 %v667
        %v776 = vpack.c.b16 %v725, %v722
        %v777 = vpack.c.b16 %v726, %v723
        %v778 = vpack.c.b16 %v727, %v724
        %v779 = vpack.c.b16 %v731, %v728
        %v780 = vpack.c.b16 %v732, %v729
        %v781 = vpack.c.b16 %v733, %v730
        %v782 = vpack.c.b16 %v737, %v734
        %v783 = vpack.c.b16 %v738, %v735
        %v784 = vpack.c.b16 %v739, %v736
        %v785 = vpack.c.b16 %v743, %v740
        %v786 = vpack.c.b16 %v744, %v741
        %v787 = vpack.c.b16 %v745, %v742
        %v788 = vpack.c.b16 %v749, %v746
        %v789 = vpack.c.b16 %v750, %v747
        %v790 = vpack.c.b16 %v751, %v748
        %v791 = vpack.c.b16 %v755, %v752
        %v792 = vpack.c.b16 %v756, %v753
        %v793 = vpack.c.b16 %v757, %v754
        %v794 = vpack.c.b16 %v761, %v758
        %v795 = vpack.c.b16 %v762, %v759
        %v796 = vpack.c.b16 %v763, %v760
        %v797 = vpack.c.b16 %v767, %v764
        %v798 = vpack.c.b16 %v768, %v765
        %v799 = vpack.c.b16 %v769, %v766
        %v800 = vpack.c.b16 %v773, %v770
        %v801 = vpack.c.b16 %v774, %v771
        %v802 = vpack.c.b16 %v775, %v772
        %vm830 = vcmask 130048
        %v832 = vsel %vm830, %v681, 0
        %v835 = vsel %vm830, %v683, 0
        %837 = vmatpush.bf16.msra.mxu0 %v797
        %838 = vmatpush.bf16.msra.mxu0 %v794
        %839 = vmatpush.bf16.msra.mxu0 %v791
        %840 = vmatpush.bf16.msra.mxu0 %v788
        %841 = vmatpush.bf16.msra.mxu0 %v785
        %842 = vmatpush.bf16.msra.mxu0 %v782
        %843 = vmatpush.bf16.msra.mxu0 %v779
        %844 = vmatpush.bf16.msra.mxu0 %v776
        %845 = vmatmul.bf16.gmra.mxu0 %v680
        %v846 = vpop.f32.mrf.mxu0
        %v847 = vadd.f32 0.0, %v846
        %v848 = vpop.f32.mrf.mxu0
        %v849 = vadd.f32 0.0, %v848
        %850 = vmatmul.bf16.gmra.mxu0 %v682
        %v851 = vpop.f32.mrf.mxu0
        %v852 = vadd.f32 0.0, %v851
        %v853 = vpop.f32.mrf.mxu0
        %v854 = vadd.f32 0.0, %v853
        %855 = vdwg.mxu0
        %856 = vmatpush.bf16.msra.mxu0 0
        %857 = vmatpush.bf16.msra.mxu0 0
        %858 = vmatpush.bf16.msra.mxu0 0
        %859 = vmatpush.bf16.msra.mxu0 0
        %860 = vmatpush.bf16.msra.mxu0 0
        %861 = vmatpush.bf16.msra.mxu0 0
        %862 = vmatpush.bf16.msra.mxu0 0
        %863 = vmatpush.bf16.msra.mxu0 %v800
        %864 = vmatmul.bf16.gmra.mxu0 %v832
        %v865 = vpop.f32.mrf.mxu0
        %v866 = vadd.f32 %v847, %v865
        %v867 = vpop.f32.mrf.mxu0
        %v868 = vadd.f32 %v849, %v867
        %869 = vmatmul.bf16.gmra.mxu0 %v835
        %v870 = vpop.f32.mrf.mxu0
        %v871 = vadd.f32 %v852, %v870
        %v872 = vpop.f32.mrf.mxu0
        %v873 = vadd.f32 %v854, %v872
        %874 = vdwg.mxu0
        %875 = vmatpush.bf16.msra.mxu0 %v798
        %876 = vmatpush.bf16.msra.mxu0 %v795
        %877 = vmatpush.bf16.msra.mxu0 %v792
        %878 = vmatpush.bf16.msra.mxu0 %v789
        %879 = vmatpush.bf16.msra.mxu0 %v786
        %880 = vmatpush.bf16.msra.mxu0 %v783
        %881 = vmatpush.bf16.msra.mxu0 %v780
        %882 = vmatpush.bf16.msra.mxu0 %v777
        %883 = vmatmul.bf16.gmra.mxu0 %v680
        %v884 = vpop.f32.mrf.mxu0
        %v885 = vadd.f32 0.0, %v884
        %v886 = vpop.f32.mrf.mxu0
        %v887 = vadd.f32 0.0, %v886
        %888 = vmatmul.bf16.gmra.mxu0 %v682
        %v889 = vpop.f32.mrf.mxu0
        %v890 = vadd.f32 0.0, %v889
        %v891 = vpop.f32.mrf.mxu0
        %v892 = vadd.f32 0.0, %v891
        %893 = vdwg.mxu0
        %894 = vmatpush.bf16.msra.mxu0 0
        %895 = vmatpush.bf16.msra.mxu0 0
        %896 = vmatpush.bf16.msra.mxu0 0
        %897 = vmatpush.bf16.msra.mxu0 0
        %898 = vmatpush.bf16.msra.mxu0 0
        %899 = vmatpush.bf16.msra.mxu0 0
        %900 = vmatpush.bf16.msra.mxu0 0
        %901 = vmatpush.bf16.msra.mxu0 %v801
        %902 = vmatmul.bf16.gmra.mxu0 %v832
        %v903 = vpop.f32.mrf.mxu0
        %v904 = vadd.f32 %v885, %v903
        %v905 = vpop.f32.mrf.mxu0
        %v906 = vadd.f32 %v887, %v905
        %907 = vmatmul.bf16.gmra.mxu0 %v835
        %v908 = vpop.f32.mrf.mxu0
        %v909 = vadd.f32 %v890, %v908
        %v910 = vpop.f32.mrf.mxu0
        %v911 = vadd.f32 %v892, %v910
        %912 = vdwg.mxu0
        %913 = vmatpush.bf16.msra.mxu0 %v799
        %914 = vmatpush.bf16.msra.mxu0 %v796
        %915 = vmatpush.bf16.msra.mxu0 %v793
        %916 = vmatpush.bf16.msra.mxu0 %v790
        %917 = vmatpush.bf16.msra.mxu0 %v787
        %918 = vmatpush.bf16.msra.mxu0 %v784
        %919 = vmatpush.bf16.msra.mxu0 %v781
        %920 = vmatpush.bf16.msra.mxu0 %v778
        %921 = vmatmul.bf16.gmra.mxu0 %v680
        %v922 = vpop.f32.mrf.mxu0
        %v923 = vadd.f32 0.0, %v922
        %v924 = vpop.f32.mrf.mxu0
        %v925 = vadd.f32 0.0, %v924
        %926 = vmatmul.bf16.gmra.mxu0 %v682
        %v927 = vpop.f32.mrf.mxu0
        %v928 = vadd.f32 0.0, %v927
        %v929 = vpop.f32.mrf.mxu0
        %v930 = vadd.f32 0.0, %v929
        %931 = vdwg.mxu0
        %932 = vmatpush.bf16.msra.mxu0 0
        %933 = vmatpush.bf16.msra.mxu0 0
        %934 = vmatpush.bf16.msra.mxu0 0
        %935 = vmatpush.bf16.msra.mxu0 0
        %936 = vmatpush.bf16.msra.mxu0 0
        %937 = vmatpush.bf16.msra.mxu0 0
        %938 = vmatpush.bf16.msra.mxu0 0
        %939 = vmatpush.bf16.msra.mxu0 %v802
        %940 = vmatmul.bf16.gmra.mxu0 %v832
        %v941 = vpop.f32.mrf.mxu0
        %v942 = vadd.f32 %v923, %v941
        %v943 = vpop.f32.mrf.mxu0
        %v944 = vadd.f32 %v925, %v943
        %945 = vmatmul.bf16.gmra.mxu0 %v835
        %v946 = vpop.f32.mrf.mxu0
        %v947 = vadd.f32 %v928, %v946
        %v948 = vpop.f32.mrf.mxu0
        %v949 = vadd.f32 %v930, %v948
        %950 = vdwg.mxu0
        %v951 = vld [vmem:[%s4] sm:$0x7]
        %v953 = vperm.slane %v951, 0
        %v954 = vperm.slane %v951, 1
        %v955 = vperm.slane %v951, 2
        %v959 = vmul.f32 %v866, %v953
        %v960 = vmul.f32 %v904, %v954
        %v961 = vmul.f32 %v942, %v955
        %v962 = vmul.f32 %v868, %v953
        %v963 = vmul.f32 %v906, %v954
        %v964 = vmul.f32 %v944, %v955
        %v965 = vmul.f32 %v871, %v953
        %v966 = vmul.f32 %v909, %v954
        %v967 = vmul.f32 %v947, %v955
        %v968 = vmul.f32 %v873, %v953
        %v969 = vmul.f32 %v911, %v954
        %v970 = vmul.f32 %v949, %v955
        %v971 = vadd.f32 %v959, %v960
        %vm972 = vcmask 261120
        %v973 = vsel %vm972, %v961, 0.0
        %v974 = vadd.f32 %v971, %v973
        %975 = vadd.xlane.f32.xlu0 %v974
        %v976 = vpop.xlane.xlu0 %975
        %v977 = vadd.f32 %v962, %v963
        %v978 = vsel %vm972, %v964, 0.0
        %v979 = vadd.f32 %v977, %v978
        %980 = vadd.xlane.f32.xlu0 %v979
        %v981 = vpop.xlane.xlu0 %980
        %v982 = vadd.f32 %v965, %v966
        %v983 = vsel %vm972, %v967, 0.0
        %v984 = vadd.f32 %v982, %v983
        %985 = vadd.xlane.f32.xlu0 %v984
        %v986 = vpop.xlane.xlu0 %985
        %v987 = vadd.f32 %v968, %v969
        %v988 = vsel %vm972, %v970, 0.0
        %v989 = vadd.f32 %v987, %v988
        %990 = vadd.xlane.f32.xlu0 %v989
        %v991 = vpop.xlane.xlu0 %990
        %v992 = vmul.f32 %v959, %v866
        %v993 = vmul.f32 %v960, %v904
        %v994 = vmul.f32 %v961, %v942
        %v995 = vmul.f32 %v962, %v868
        %v996 = vmul.f32 %v963, %v906
        %v997 = vmul.f32 %v964, %v944
        %v998 = vmul.f32 %v965, %v871
        %v999 = vmul.f32 %v966, %v909
        %v1000 = vmul.f32 %v967, %v947
        %v1001 = vmul.f32 %v968, %v873
        %v1002 = vmul.f32 %v969, %v911
        %v1003 = vmul.f32 %v970, %v949
        %v1004 = vadd.f32 %v992, %v993
        %v1005 = vsel %vm972, %v994, 0.0
        %v1006 = vadd.f32 %v1004, %v1005
        %1007 = vadd.xlane.f32.xlu0 %v1006
        %v1008 = vpop.xlane.xlu0 %1007
        %v1009 = vadd.f32 %v995, %v996
        %v1010 = vsel %vm972, %v997, 0.0
        %v1011 = vadd.f32 %v1009, %v1010
        %1012 = vadd.xlane.f32.xlu0 %v1011
        %v1013 = vpop.xlane.xlu0 %1012
        %v1014 = vadd.f32 %v998, %v999
        %v1015 = vsel %vm972, %v1000, 0.0
        %v1016 = vadd.f32 %v1014, %v1015
        %1017 = vadd.xlane.f32.xlu0 %v1016
        %v1018 = vpop.xlane.xlu0 %1017
        %v1019 = vadd.f32 %v1001, %v1002
        %v1020 = vsel %vm972, %v1003, 0.0
        %v1021 = vadd.f32 %v1019, %v1020
        %1022 = vadd.xlane.f32.xlu0 %v1021
        %v1023 = vpop.xlane.xlu0 %1022
        %vm1024 = vcmask 7168
        %v1025 = vsel %vm1024, %v976, %v1008
        %v1026 = vsel %vm1024, %v981, %v1013
        %v1027 = vsel %vm1024, %v986, %v1018
        %v1028 = vsel %vm1024, %v991, %v1023
        %v1029 = vld [vmem:[#allocation6] sm:$0xff]
        %v1030 = vld [vmem:[#allocation6 + $0x8] sm:$0xff]
        %v1031 = vld [vmem:[#allocation6 + $0x10] sm:$0xff]
        %v1032 = vld [vmem:[#allocation6 + $0x18] sm:$0xff]
        %v1034 = vsel %vm972, %v1029, 0
        %v1037 = vsel %vm972, %v1030, 0
        %v1040 = vsel %vm972, %v1031, 0
        %v1043 = vsel %vm972, %v1032, 0
        %1045 = vmatpush.msra.mxu0 0.0
        %1046 = vmatpush.msra.mxu0 0.0
        %1047 = vmatpush.msra.mxu0 0.0
        %1048 = vmatpush.msra.mxu0 0.0
        %1049 = vmatpush.msra.mxu0 0.0
        %1050 = vmatpush.msra.mxu0 0.0
        %1051 = vmatpush.msra.mxu0 0.0
        %1052 = vmatpush.msra.mxu0 0.0
        %1053 = vmatpush.msra.mxu0 0.0
        %1054 = vmatpush.msra.mxu0 0.0
        %1055 = vmatpush.msra.mxu0 0.0
        %1056 = vmatpush.msra.mxu0 0.0
        %1057 = vmatpush.msra.mxu0 %v1028
        %1058 = vmatpush.msra.mxu0 %v1027
        %1059 = vmatpush.msra.mxu0 %v1026
        %1060 = vmatpush.msra.mxu0 %v1025
        %1061 = vmatmul.f32.gmra.mxu0 %v1034
        %v1062 = vpop.f32.mrf.mxu0
        %v1063 = vadd.f32 0.0, %v1062
        %1064 = vmatmul.f32.gmra.mxu0 %v1037
        %v1065 = vpop.f32.mrf.mxu0
        %v1066 = vadd.f32 0.0, %v1065
        %1067 = vmatmul.f32.gmra.mxu0 %v1040
        %v1068 = vpop.f32.mrf.mxu0
        %v1069 = vadd.f32 0.0, %v1068
        %1070 = vmatmul.f32.gmra.mxu0 %v1043
        %v1071 = vpop.f32.mrf.mxu0
        %v1072 = vadd.f32 0.0, %v1071
        %1073 = vdwg.mxu0
        %v1074 = vmul.f32 %v1063, %v1063
        %v1075 = vmul.f32 %v1066, %v1066
        %v1076 = vmul.f32 %v1069, %v1069
        %v1077 = vmul.f32 %v1072, %v1072
        %1082 = vrot.lane.b32.xlu0 %v1074, 1
        %v1083 = vpop.permute.xlu0 %1082
        %1084 = vrot.lane.b32.xlu0 %v1075, 1
        %v1085 = vpop.permute.xlu0 %1084
        %1086 = vrot.lane.b32.xlu0 %v1076, 1
        %v1087 = vpop.permute.xlu0 %1086
        %1088 = vrot.lane.b32.xlu0 %v1077, 1
        %v1089 = vpop.permute.xlu0 %1088
        %v1094 = vsub.f32 %v1063, %v1083
        %v1095 = vsub.f32 %v1066, %v1085
        %v1096 = vsub.f32 %v1069, %v1087
        %v1097 = vsub.f32 %v1072, %v1089
        %v1098 = vmax.f32 %v1094, 0.0
        %v1099 = vmax.f32 %v1095, 0.0
        %v1100 = vmax.f32 %v1096, 0.0
        %v1101 = vmax.f32 %v1097, 0.0
        %1103 = vset.pattern.permute.xlu0 0
        %1104 = vperm.xlu0 %1103, %v1063
        %v1105 = vpop.permute.xlu0 %1104
        %1108 = vset.pattern.permute.xlu0 0
        %1109 = vperm.xlu0 %1108, %v1066
        %v1110 = vpop.permute.xlu0 %1109
        %1113 = vset.pattern.permute.xlu0 0
        %1114 = vperm.xlu0 %1113, %v1069
        %v1115 = vpop.permute.xlu0 %1114
        %1118 = vset.pattern.permute.xlu0 0
        %1119 = vperm.xlu0 %1118, %v1072
        %v1120 = vpop.permute.xlu0 %1119
        %v1122 = vsub.f32 %v866, %v1105
        %v1123 = vsub.f32 %v904, %v1105
        %v1124 = vsub.f32 %v942, %v1105
        %v1125 = vsub.f32 %v868, %v1110
        %v1126 = vsub.f32 %v906, %v1110
        %v1127 = vsub.f32 %v944, %v1110
        %v1128 = vsub.f32 %v871, %v1115
        %v1129 = vsub.f32 %v909, %v1115
        %v1130 = vsub.f32 %v947, %v1115
        %v1131 = vsub.f32 %v873, %v1120
        %v1132 = vsub.f32 %v911, %v1120
        %v1133 = vsub.f32 %v949, %v1120
        %v1134 = vadd.f32 %v1098, 1e-05
        %v1135 = vadd.f32 %v1099, 1e-05
        %v1136 = vadd.f32 %v1100, 1e-05
        %v1137 = vadd.f32 %v1101, 1e-05
        %v1138 = vrsqrt.pop %v1134
        %v1139 = vmul.f32 %v1138, %v1134
        %v1140 = vmul.f32 %v1139, %v1138
        %v1141 = vmul.f32 0.5, %v1140
        %v1142 = vsub.f32 1.5, %v1141
        %v1143 = vmul.f32 %v1138, %v1142
        %vm1144 = vweird.f32 %v1134
        %vm1145 = vweird.f32 %v1138
        %vm1146 = vmor %vm1144, %vm1145
        %v1147 = vsel %vm1146, %v1138, %v1143
        %v1148 = vrsqrt.pop %v1135
        %v1149 = vmul.f32 %v1148, %v1135
        %v1150 = vmul.f32 %v1149, %v1148
        %v1151 = vmul.f32 0.5, %v1150
        %v1152 = vsub.f32 1.5, %v1151
        %v1153 = vmul.f32 %v1148, %v1152
        %vm1154 = vweird.f32 %v1135
        %vm1155 = vweird.f32 %v1148
        %vm1156 = vmor %vm1154, %vm1155
        %v1157 = vsel %vm1156, %v1148, %v1153
        %v1158 = vrsqrt.pop %v1136
        %v1159 = vmul.f32 %v1158, %v1136
        %v1160 = vmul.f32 %v1159, %v1158
        %v1161 = vmul.f32 0.5, %v1160
        %v1162 = vsub.f32 1.5, %v1161
        %v1163 = vmul.f32 %v1158, %v1162
        %vm1164 = vweird.f32 %v1136
        %vm1165 = vweird.f32 %v1158
        %vm1166 = vmor %vm1164, %vm1165
        %v1167 = vsel %vm1166, %v1158, %v1163
        %v1168 = vrsqrt.pop %v1137
        %v1169 = vmul.f32 %v1168, %v1137
        %v1170 = vmul.f32 %v1169, %v1168
        %v1171 = vmul.f32 0.5, %v1170
        %v1172 = vsub.f32 1.5, %v1171
        %v1173 = vmul.f32 %v1168, %v1172
        %vm1174 = vweird.f32 %v1137
        %vm1175 = vweird.f32 %v1168
        %vm1176 = vmor %vm1174, %vm1175
        %v1177 = vsel %vm1176, %v1168, %v1173
        %1179 = vset.pattern.permute.xlu0 1
        %1180 = vperm.xlu0 %1179, %v1147
        %v1181 = vpop.permute.xlu0 %1180
        %1184 = vset.pattern.permute.xlu0 1
        %1185 = vperm.xlu0 %1184, %v1157
        %v1186 = vpop.permute.xlu0 %1185
        %1189 = vset.pattern.permute.xlu0 1
        %1190 = vperm.xlu0 %1189, %v1167
        %v1191 = vpop.permute.xlu0 %1190
        %1194 = vset.pattern.permute.xlu0 1
        %1195 = vperm.xlu0 %1194, %v1177
        %v1196 = vpop.permute.xlu0 %1195
        %v1198 = vmul.f32 %v1122, %v1181
        %v1199 = vmul.f32 %v1123, %v1181
        %v1200 = vmul.f32 %v1124, %v1181
        %v1201 = vmul.f32 %v1125, %v1186
        %v1202 = vmul.f32 %v1126, %v1186
        %v1203 = vmul.f32 %v1127, %v1186
        %v1204 = vmul.f32 %v1128, %v1191
        %v1205 = vmul.f32 %v1129, %v1191
        %v1206 = vmul.f32 %v1130, %v1191
        %v1207 = vmul.f32 %v1131, %v1196
        %v1208 = vmul.f32 %v1132, %v1196
        %v1209 = vmul.f32 %v1133, %v1196
        %v1210 = vld [vmem:[%s344] sm:$0xff]
        %v1211 = vld [vmem:[%s344 + $0x8] sm:$0xff]
        %v1212 = vld [vmem:[%s344 + $0x10] sm:$0xff]
        %v1213 = vld [vmem:[%s344 + $0x18] sm:$0xff]
        %1215 = vset.pattern.permute.xlu0 0
        %1216 = vperm.xlu0 %1215, %v1210
        %v1217 = vpop.permute.xlu0 %1216
        %1220 = vset.pattern.permute.xlu0 0
        %1221 = vperm.xlu0 %1220, %v1211
        %v1222 = vpop.permute.xlu0 %1221
        %1225 = vset.pattern.permute.xlu0 0
        %1226 = vperm.xlu0 %1225, %v1212
        %v1227 = vpop.permute.xlu0 %1226
        %1230 = vset.pattern.permute.xlu0 0
        %1231 = vperm.xlu0 %1230, %v1213
        %v1232 = vpop.permute.xlu0 %1231
        %v1234 = vmul.f32 %v1198, %v1217
        %v1235 = vmul.f32 %v1199, %v1217
        %v1236 = vmul.f32 %v1200, %v1217
        %v1237 = vmul.f32 %v1201, %v1222
        %v1238 = vmul.f32 %v1202, %v1222
        %v1239 = vmul.f32 %v1203, %v1222
        %v1240 = vmul.f32 %v1204, %v1227
        %v1241 = vmul.f32 %v1205, %v1227
        %v1242 = vmul.f32 %v1206, %v1227
        %v1243 = vmul.f32 %v1207, %v1232
        %v1244 = vmul.f32 %v1208, %v1232
        %v1245 = vmul.f32 %v1209, %v1232
        %v1246 = vld [vmem:[%s350] sm:$0xff]
        %v1247 = vld [vmem:[%s350 + $0x8] sm:$0xff]
        %v1248 = vld [vmem:[%s350 + $0x10] sm:$0xff]
        %v1249 = vld [vmem:[%s350 + $0x18] sm:$0xff]
        %1251 = vset.pattern.permute.xlu0 0
        %1252 = vperm.xlu0 %1251, %v1246
        %v1253 = vpop.permute.xlu0 %1252
        %1256 = vset.pattern.permute.xlu0 0
        %1257 = vperm.xlu0 %1256, %v1247
        %v1258 = vpop.permute.xlu0 %1257
        %1261 = vset.pattern.permute.xlu0 0
        %1262 = vperm.xlu0 %1261, %v1248
        %v1263 = vpop.permute.xlu0 %1262
        %1266 = vset.pattern.permute.xlu0 0
        %1267 = vperm.xlu0 %1266, %v1249
        %v1268 = vpop.permute.xlu0 %1267
        %v1270 = vadd.f32 %v1234, %v1253
        %v1271 = vadd.f32 %v1235, %v1253
        %v1272 = vadd.f32 %v1236, %v1253
        %v1273 = vadd.f32 %v1237, %v1258
        %v1274 = vadd.f32 %v1238, %v1258
        %v1275 = vadd.f32 %v1239, %v1258
        %v1276 = vadd.f32 %v1240, %v1263
        %v1277 = vadd.f32 %v1241, %v1263
        %v1278 = vadd.f32 %v1242, %v1263
        %v1279 = vadd.f32 %v1243, %v1268
        %v1280 = vadd.f32 %v1244, %v1268
        %v1281 = vadd.f32 %v1245, %v1268
        %v1282 = vmax.f32 %v1270, 0.0
        %v1283 = vmax.f32 %v1271, 0.0
        %v1284 = vmax.f32 %v1272, 0.0
        %v1285 = vmax.f32 %v1273, 0.0
        %v1286 = vmax.f32 %v1274, 0.0
        %v1287 = vmax.f32 %v1275, 0.0
        %v1288 = vmax.f32 %v1276, 0.0
        %v1289 = vmax.f32 %v1277, 0.0
        %v1290 = vmax.f32 %v1278, 0.0
        %v1291 = vmax.f32 %v1279, 0.0
        %v1292 = vmax.f32 %v1280, 0.0
        %v1293 = vmax.f32 %v1281, 0.0
        %1294 = vst [vmem:[%s333] sm:$0xff] %v1282
        %1295 = vst [vmem:[%s333 + $0x8] sm:$0xff] %v1283
        %1296 = vst.msk [vmem:[%s333 + $0x10] sm:$0xff] %vm972, %v1284
        %1297 = vst [vmem:[%s333 + $0x18] sm:$0xff] %v1285
        %1298 = vst [vmem:[%s333 + $0x20] sm:$0xff] %v1286
        %1299 = vst.msk [vmem:[%s333 + $0x28] sm:$0xff] %vm972, %v1287
        %1300 = vst [vmem:[%s333 + $0x30] sm:$0xff] %v1288
        %1301 = vst [vmem:[%s333 + $0x38] sm:$0xff] %v1289
        %1302 = vst.msk [vmem:[%s333 + $0x40] sm:$0xff] %vm972, %v1290
        %1303 = vst [vmem:[%s333 + $0x48] sm:$0xff] %v1291
        %1304 = vst [vmem:[%s333 + $0x50] sm:$0xff] %v1292
        %1305 = vst.msk [vmem:[%s333 + $0x58] sm:$0xff] %vm972, %v1293
        %s1306 = sand.u32 %s190, 1
        %s1307 = scalar_lea.sflag [#allocation5], %s1306
        %s1308 = sand.u32 %s190, 1
        %s1309 = smul.addr %s1308, 96
        %s1310 = scalar_lea.vmem [#allocation8], %s1309
        // Predicated region
        $region53: #{tpu_custom_call.1} parent=43 // pred_check
          %p1311 = pneg %p200
        $region54: #{tpu_custom_call.1} parent=43 // pred_check_branch
          %1313 = sbr.rel (%p1311) target = $region56
        $region55: #{tpu_custom_call.1} parent=43 // pred_region
          %s1314 = smul.u32 4, %s27
          %1316 = vsyncadd %s1307, 0
          %s1317 = smul.addr %s1314, 3
          %s1318 = smul.addr %s26, 12
          %s1319 = sadd.s32 %s1317, %s1318
          %s1320 = smul.addr %s1319, 8
          %s1321 = scalar_lea.hbm %s6, %s1320
          %s1322 = sshll.u32 %s1310, 4
          %s1323 = int_to_ptr.vmem [resolvable:$true] %s1322
          %s1324 = sshll.u32 %s1321, 4
          %s1325 = int_to_ptr.hbm [resolvable:$true] %s1324
          %1330 = dma.vmem_to_hbm [thread:$0]  %s1323, 1536, %s1325, %s1307, 384, 384, 24
        $region56: #{tpu_custom_call.1} parent=43 // pred_fallthru
          _
      $region44: #{tpu_custom_call.1} parent=5 // pred_fallthru
        _
      %p1331 = scmp.le.s32.totalorder 2, %s17
      // Predicated region
      $region57: #{tpu_custom_call.1} parent=5 // pred_check
        %p1332 = pneg %p1331
      $region58: #{tpu_custom_call.1} parent=5 // pred_check_branch
        %1334 = sbr.rel (%p1332) target = $region60
      $region59: #{tpu_custom_call.1} parent=5 // pred_region
        %s1335 = ssub.s32 %s17, 2
        // Predicated region
        $region61: #{tpu_custom_call.1} parent=59 // pred_check
          %p1336 = pneg %p206
        $region62: #{tpu_custom_call.1} parent=59 // pred_check_branch
          %1338 = sbr.rel (%p1336) target = $region64
        $region63: #{tpu_custom_call.1} parent=59 // pred_region
          %s1339 = sand.u32 %s191, 1
          %s1340 = scalar_lea.sflag [#allocation5], %s1339
          %s1341 = sand.u32 %s191, 1
          %s1342 = smul.addr %s1341, 96
          %s1343 = scalar_lea.vmem [#allocation8], %s1342
          %1345 = dma.done %s1340, 1536
        $region64: #{tpu_custom_call.1} parent=59 // pred_fallthru
          _
      $region60: #{tpu_custom_call.1} parent=5 // pred_fallthru
        _
    $region6: #{tpu_custom_call.1} parent=1 // loop_footer
      %s21 = sadd.s32 1, %s17
    $region7: #{tpu_custom_call.1} parent=1 // loop_footer_branch
      %16 = sbr.rel target = $region3
    $region8: #{tpu_custom_call.1} parent=1 // loop_exit
      _
    %1346 = vsyncpa [#allocation4], 1
    %s1347 = scalar_lea.sflag [#allocation4], 1
    %1348 = vsyncpa %s1347, 1
    %1349 = vsyncpa [#allocation7], 1
    %1350 = vsyncpa [#allocation5], 1
    %s1351 = scalar_lea.sflag [#allocation5], 1
    %1352 = vsyncpa %s1351, 1

</llo_original>
